<compile_context>
chip_gen: v6e
topology: v6e:2x2x1
jax: 0.10.0
libtpu: 0.0.40
codegen_flags: <defaults>
</compile_context>

<pallas_src>
import functools

import jax
import jax.numpy as jnp
import numpy as np
from jax import lax
from jax.experimental import pallas as pl
from jax.experimental.pallas import tpu as pltpu

LRELU_SLOPE = 0.01      # PyTorch nn.LeakyReLU default negative_slope
LANE = 128


def _round_up(x, m):
    return (x + m - 1) // m * m


# ------------------------------ fused kernel --------------------------------

def _make_fused_kernel(Th, Wo, Ho, n_strips, Co_pad):
    """conv1+lrelu -> conv2 -> GDN -> + 1x1 skip, for one (image, row strip)."""
    Mh = (Th + 2) * Wo      # rows incl. 1-row conv2 halo on each side
    Mo = Th * Wo            # output rows per grid step

    def kernel(p_ref, w1aug_ref, b1_ref, bsk_ref, w2_ref, b2_ref,
               gma_ref, beta_ref, o_ref):
        strip = pl.program_id(0) % n_strips
        g0 = strip * Th - 1                        # global Ho-row of halo row 0

        patches = p_ref[0].reshape(Mh, -1)         # ((Th+2)*Wo, K1p) bf16

        # conv1 (3x3, stride s) and 1x1 skip fused into ONE MXU pass.
        both = jnp.dot(patches, w1aug_ref[...],
                       preferred_element_type=jnp.float32)     # (Mh, 2*Co_pad)

        c1 = both[:, :Co_pad] + b1_ref[...]
        c1 = jnp.where(c1 >= 0, c1, LRELU_SLOPE * c1)          # LeakyReLU
        c1 = c1.reshape(Th + 2, Wo, Co_pad)
        # Zero out-of-image halo rows == conv2's zero padding along H.
        hrow = lax.broadcasted_iota(jnp.int32, (Th + 2, Wo, Co_pad), 0) + g0
        c1 = jnp.where((hrow >= 0) & (hrow < Ho), c1, 0.0).astype(jnp.bfloat16)

        skip = both[:, Co_pad:] + bsk_ref[...]
        skip = skip.reshape(Th + 2, Wo, Co_pad)[1:Th + 1].reshape(Mo, Co_pad)

        # conv2 (3x3, stride 1): pad W in-registers, accumulate 9 tap matmuls.
        zcol = jnp.zeros((Th + 2, 1, Co_pad), jnp.bfloat16)
        out1p = jnp.concatenate([zcol, c1, zcol], axis=1)      # (Th+2, Wo+2, Cp)
        c2 = jnp.zeros((Mo, Co_pad), jnp.float32) + b2_ref[...]
        for t in range(9):
            kh, kw = t // 3, t % 3
            tap = out1p[kh:kh + Th, kw:kw + Wo, :].reshape(Mo, Co_pad)
            c2 = c2 + jnp.dot(tap, w2_ref[t],
                              preferred_element_type=jnp.float32)

        # GDN: y = c2 * rsqrt(beta + c2^2 @ gamma^T)   (f32 channel mix)
        z = jnp.dot(c2 * c2, gma_ref[...],
                    preferred_element_type=jnp.float32) + beta_ref[...]
        y = c2 * lax.rsqrt(z)

        out = y + skip
        o_ref[...] = out.reshape(1, Th, Wo, Co_pad).astype(o_ref.dtype)

    return kernel


# --------------------------------- glue -------------------------------------

def _extract_patches_3x3(x_nhwc, stride):
    """im2col for a 3x3 kernel, padding=1 -> (N, Ho, Wo, 9*C), taps (kh,kw,ci)."""
    N, H, W, C = x_nhwc.shape
    xp = jnp.pad(x_nhwc, ((0, 0), (1, 1), (1, 1), (0, 0)))
    Ho = (H + 2 - 3) // stride + 1
    Wo = (W + 2 - 3) // stride + 1
    taps = []
    for kh in range(3):
        for kw in range(3):
            taps.append(xp[:, kh:kh + stride * (Ho - 1) + 1:stride,
                           kw:kw + stride * (Wo - 1) + 1:stride, :])
    return jnp.concatenate(taps, axis=-1), (Ho, Wo)


@functools.partial(jax.jit, static_argnames=("stride", "row_tile"))
def residual_block_with_stride(x_nchw, params, stride=2, row_tile=4):
    """Forward pass of ResidualBlockWithStride. Input/output are NCHW float32.

    The identity-skip case (stride==1 and in_ch==out_ch) is representable by
    passing wskip = identity, bskip = 0; otherwise a learned 1x1 skip applies.
    """
    Co, Ci = params["w1"].shape[0], params["w1"].shape[1]
    Co_pad = _round_up(Co, LANE)
    K1 = 9 * Ci
    K1p = _round_up(K1, LANE)

    # NCHW -> NHWC once, in bf16 (halves transpose / patch HBM traffic).
    x = jnp.transpose(x_nchw.astype(jnp.bfloat16), (0, 2, 3, 1))
    N = x.shape[0]

    # conv1 im2col at the (downsampled) output grid.  The centre-tap columns
    # [4*Ci:5*Ci] are exactly the stride-s sampled x needed by the skip conv.
    p1, (Ho, Wo) = _extract_patches_3x3(x, stride)
    p1 = jnp.pad(p1, ((0, 0), (0, 0), (0, 0), (0, K1p - K1)))

    # Row-strip tiling: Th output rows per grid step (+1 halo row each side for
    # conv2).  Pick Th per-generation from the VMEM budget (v7x: 64 MiB total).
    Th = max(d for d in range(1, min(row_tile, Ho) + 1) if Ho % d == 0)
    n_strips = Ho // Th

    p1p = jnp.pad(p1, ((0, 0), (1, 1), (0, 0), (0, 0)))         # zero halo rows
    p1_strips = jnp.stack(
        [p1p[:, s * Th:s * Th + Th + 2] for s in range(n_strips)], axis=1)
    p1_strips = p1_strips.reshape(N * n_strips, Th + 2, Wo, K1p)

    # ---- weights: pad channels to 128, pack conv1 + skip into one matrix ----
    f32 = jnp.float32
    w1mat = jnp.transpose(params["w1"], (2, 3, 1, 0)).reshape(K1, Co)
    w1mat = jnp.pad(w1mat, ((0, K1p - K1), (0, Co_pad - Co)))
    wsk_full = jnp.zeros((K1p, Co_pad), f32)
    wsk_full = wsk_full.at[4 * Ci:5 * Ci, :Co].set(
        params["wskip"].reshape(Co, Ci).T)
    w1aug = jnp.concatenate([w1mat, wsk_full], axis=1).astype(jnp.bfloat16)

    w2t = jnp.transpose(params["w2"], (2, 3, 1, 0)).reshape(9, Co, Co)
    w2t = jnp.pad(w2t, ((0, 0), (0, Co_pad - Co), (0, Co_pad - Co)))
    w2t = w2t.astype(jnp.bfloat16)

    b1 = jnp.pad(params["b1"], (0, Co_pad - Co)).reshape(1, Co_pad).astype(f32)
    b2 = jnp.pad(params["b2"], (0, Co_pad - Co)).reshape(1, Co_pad).astype(f32)
    bsk = jnp.pad(params["bskip"], (0, Co_pad - Co)).reshape(1, Co_pad).astype(f32)
    gammaT = jnp.pad(params["gamma"].T,
                     ((0, Co_pad - Co), (0, Co_pad - Co))).astype(f32)
    beta = jnp.pad(params["beta"], (0, Co_pad - Co),
                   constant_values=1.0).reshape(1, Co_pad).astype(f32)

    # ---- pallas_call ----
    kernel = _make_fused_kernel(Th, Wo, Ho, n_strips, Co_pad)
    M = N * Ho * Wo
    Mh = N * n_strips * (Th + 2) * Wo
    flops = (2 * Mh * K1p * 2 * Co_pad          # conv1 + skip (one MXU pass)
             + 2 * M * 9 * Co_pad * Co_pad      # conv2
             + 2 * M * Co_pad * Co_pad)         # GDN channel mix
    bytes_accessed = (p1_strips.size * 2 + w1aug.size * 2 + w2t.size * 2
                      + gammaT.size * 4
                      + (b1.size + b2.size + bsk.size + beta.size) * 4
                      + N * n_strips * Th * Wo * Co_pad * 4)
    cost = pl.CostEstimate(flops=int(flops), transcendentals=int(M * Co_pad),
                           bytes_accessed=int(bytes_accessed))

    const2 = lambda i: (0, 0)
    out = pl.pallas_call(
        kernel,
        out_shape=jax.ShapeDtypeStruct((N * n_strips, Th, Wo, Co_pad), f32),
        grid=(N * n_strips,),
        in_specs=[
            pl.BlockSpec((1, Th + 2, Wo, K1p), lambda i: (i, 0, 0, 0)),
            pl.BlockSpec((K1p, 2 * Co_pad), const2),
            pl.BlockSpec((1, Co_pad), const2),
            pl.BlockSpec((1, Co_pad), const2),
            pl.BlockSpec((9, Co_pad, Co_pad), lambda i: (0, 0, 0)),
            pl.BlockSpec((1, Co_pad), const2),
            pl.BlockSpec((Co_pad, Co_pad), const2),
            pl.BlockSpec((1, Co_pad), const2),
        ],
        out_specs=pl.BlockSpec((1, Th, Wo, Co_pad), lambda i: (i, 0, 0, 0)),
        compiler_params=pltpu.CompilerParams(
            dimension_semantics=("parallel",),
            vmem_limit_bytes=32 * 1024 * 1024),
        cost_estimate=cost,
    )(p1_strips, w1aug, b1, bsk, w2t, b2, gammaT, beta)

    out = out.reshape(N, Ho, Wo, Co_pad)[..., :Co]
    return jnp.transpose(out, (0, 3, 1, 2))                     # back to NCHW


# ----------------------------- pure-JAX reference ---------------------------

def _conv_ref(x_nhwc, w_oihw, b, stride, pad):
    w_hwio = jnp.transpose(w_oihw, (2, 3, 1, 0))
    y = jax.lax.conv_general_dilated(
        x_nhwc, w_hwio, (stride, stride), [(pad, pad), (pad, pad)],
        dimension_numbers=("NHWC", "HWIO", "NHWC"))
    return y + b.reshape(1, 1, 1, -1)


def _ref_forward(x_nchw, params, stride=2):
    x = jnp.transpose(x_nchw, (0, 2, 3, 1)).astype(jnp.float32)
    out = _conv_ref(x, params["w1"], params["b1"], stride, 1)
    out = jnp.where(out >= 0, out, LRELU_SLOPE * out)
    out = _conv_ref(out, params["w2"], params["b2"], 1, 1)
    Co = params["gamma"].shape[0]
    z = _conv_ref(out * out, params["gamma"].reshape(Co, Co, 1, 1),
                  params["beta"], 1, 0)
    out = out * jax.lax.rsqrt(z)
    ident = _conv_ref(x, params["wskip"], params["bskip"], stride, 0)
    out = out + ident
    return jnp.transpose(out, (0, 3, 1, 2))


# ---------------------------------- main ------------------------------------

if __name__ == "__main__":
    key = jax.random.PRNGKey(0)
    in_ch, out_ch, stride = 4, 8, 2
    N, H, W = 2, 16, 16

    ks = jax.random.split(key, 9)
    params = {
        "w1": 0.1 * jax.random.normal(ks[0], (out_ch, in_ch, 3, 3), jnp.float32),
        "b1": 0.05 * jax.random.normal(ks[1], (out_ch,), jnp.float32),
        "w2": 0.1 * jax.random.normal(ks[2], (out_ch, out_ch, 3, 3), jnp.float32),
        "b2": 0.05 * jax.random.normal(ks[3], (out_ch,), jnp.float32),
        # GDN params (compressai-style: nonnegative; gamma ~ 0.1*I, beta ~ 1)
        "gamma": 0.1 * jnp.eye(out_ch, dtype=jnp.float32)
                 + 0.01 * jax.random.uniform(ks[4], (out_ch, out_ch), jnp.float32),
        "beta": 1.0 + 0.1 * jax.random.uniform(ks[5], (out_ch,), jnp.float32),
        "wskip": 0.1 * jax.random.normal(ks[6], (out_ch, in_ch, 1, 1), jnp.float32),
        "bskip": 0.05 * jax.random.normal(ks[7], (out_ch,), jnp.float32),
    }
    x = jax.random.normal(ks[8], (N, in_ch, H, W), jnp.float32)

    y = residual_block_with_stride(x, params, stride=stride, row_tile=4)
    y = jax.block_until_ready(y)

    y_ref = jax.block_until_ready(_ref_forward(x, params, stride=stride))
    assert y.shape == (N, out_ch, H // stride, W // stride), y.shape
    # bf16 MXU inputs (f32 accumulation) -> loosened tolerance vs f32 reference.
    np.testing.assert_allclose(np.asarray(y), np.asarray(y_ref),
                               rtol=2e-2, atol=2e-2)
    print("KERNEL_OK")
</pallas_src>

<mosaic_0001>
module attributes {stable_mosaic.version = 11 : i64} {
  func.func @kernel(%arg0: i32, %arg1: memref<1x6x8x128xbf16, #tpu.memory_space<vmem>>, %arg2: memref<128x256xbf16, #tpu.memory_space<vmem>>, %arg3: memref<1x128xf32, #tpu.memory_space<vmem>>, %arg4: memref<1x128xf32, #tpu.memory_space<vmem>>, %arg5: memref<9x128x128xbf16, #tpu.memory_space<vmem>>, %arg6: memref<1x128xf32, #tpu.memory_space<vmem>>, %arg7: memref<128x128xf32, #tpu.memory_space<vmem>>, %arg8: memref<1x128xf32, #tpu.memory_space<vmem>>, %arg9: memref<1x4x8x128xf32, #tpu.memory_space<vmem>>) attributes {dimension_semantics = [#tpu.dimension_semantics<parallel>], iteration_bounds = array<i64: 4>, scalar_prefetch = 0 : i64, scratch_operands = 0 : i64, tpu.core_type = #tpu.core_type<tc>, window_params = [{transform_indices = @transform_0, window_bounds = array<i64: 1, 6, 8, 128>}, {pipeline_mode = #tpu.pipeline_mode<synchronous>, transform_indices = @transform_1, window_bounds = array<i64: 128, 256>}, {pipeline_mode = #tpu.pipeline_mode<synchronous>, transform_indices = @transform_2, window_bounds = array<i64: 1, 128>}, {pipeline_mode = #tpu.pipeline_mode<synchronous>, transform_indices = @transform_3, window_bounds = array<i64: 1, 128>}, {pipeline_mode = #tpu.pipeline_mode<synchronous>, transform_indices = @transform_4, window_bounds = array<i64: 9, 128, 128>}, {pipeline_mode = #tpu.pipeline_mode<synchronous>, transform_indices = @transform_5, window_bounds = array<i64: 1, 128>}, {pipeline_mode = #tpu.pipeline_mode<synchronous>, transform_indices = @transform_6, window_bounds = array<i64: 128, 128>}, {pipeline_mode = #tpu.pipeline_mode<synchronous>, transform_indices = @transform_7, window_bounds = array<i64: 1, 128>}, {transform_indices = @transform_8, window_bounds = array<i64: 1, 4, 8, 128>}]} {
    %c2_i32 = arith.constant 2 : i32
    %c0_i32 = arith.constant 0 : i32
    %0 = arith.cmpi eq, %c2_i32, %c0_i32 : i32
    %c1_i32 = arith.constant 1 : i32
    %1 = arith.select %0, %c1_i32, %c2_i32 : i32
    %2 = arith.remsi %arg0, %1 : i32
    %c0_i32_0 = arith.constant 0 : i32
    %3 = arith.cmpi ne, %2, %c0_i32_0 : i32
    %c0_i32_1 = arith.constant 0 : i32
    %4 = arith.cmpi slt, %2, %c0_i32_1 : i32
    %c0_i32_2 = arith.constant 0 : i32
    %5 = arith.cmpi slt, %1, %c0_i32_2 : i32
    %6 = arith.xori %4, %5 : i1
    %7 = arith.andi %6, %3 : i1
    %8 = arith.addi %2, %1 : i32
    %9 = arith.select %7, %8, %2 : i32
    %c4_i32 = arith.constant 4 : i32
    %10 = arith.muli %9, %c4_i32 : i32
    %c1_i32_3 = arith.constant 1 : i32
    %11 = arith.subi %10, %c1_i32_3 : i32
    %c0 = arith.constant 0 : index
    %c0_4 = arith.constant 0 : index
    %c0_5 = arith.constant 0 : index
    %c0_6 = arith.constant 0 : index
    %12 = vector.load %arg1[%c0, %c0_4, %c0_5, %c0_6] : memref<1x6x8x128xbf16, #tpu.memory_space<vmem>>, vector<1x6x8x128xbf16>
    %13 = vector.shape_cast %12 : vector<1x6x8x128xbf16> to vector<6x8x128xbf16>
    %14 = vector.shape_cast %13 : vector<6x8x128xbf16> to vector<48x128xbf16>
    %c0_7 = arith.constant 0 : index
    %c0_8 = arith.constant 0 : index
    %15 = vector.load %arg2[%c0_7, %c0_8] : memref<128x256xbf16, #tpu.memory_space<vmem>>, vector<128x256xbf16>
    %cst = arith.constant dense<0.000000e+00> : vector<48x256xf32>
    %16 = tpu.matmul %14, %15, %cst {dimension_numbers = #tpu.dot_dimension_numbers<[1], [0], [0], [1], [0, 0, 1, 1], [], []>} : vector<48x128xbf16>, vector<128x256xbf16>, vector<48x256xf32> -> vector<48x256xf32>
    %17 = vector.extract_strided_slice %16 {offsets = [0, 0], sizes = [48, 128], strides = [1, 1]} : vector<48x256xf32> to vector<48x128xf32>
    %c0_9 = arith.constant 0 : index
    %c0_10 = arith.constant 0 : index
    %18 = vector.load %arg3[%c0_9, %c0_10] : memref<1x128xf32, #tpu.memory_space<vmem>>, vector<1x128xf32>
    %19 = vector.broadcast %18 : vector<1x128xf32> to vector<48x128xf32>
    %20 = arith.addf %17, %19 : vector<48x128xf32>
    %cst_11 = arith.constant 0.000000e+00 : f32
    %21 = vector.broadcast %cst_11 : f32 to vector<48x128xf32>
    %22 = arith.cmpf oge, %20, %21 : vector<48x128xf32>
    %cst_12 = arith.constant 0.00999999977 : f32
    %23 = vector.broadcast %cst_12 : f32 to vector<48x128xf32>
    %24 = arith.mulf %23, %20 : vector<48x128xf32>
    %25 = arith.select %22, %20, %24 : vector<48x128xi1>, vector<48x128xf32>
    %26 = vector.shape_cast %25 : vector<48x128xf32> to vector<6x8x128xf32>
    %27 = tpu.iota {dimensions = array<i32: 0>} : vector<6x8x128xi32>
    %28 = vector.broadcast %11 : i32 to vector<6x8x128xi32>
    %29 = arith.addi %27, %28 : vector<6x8x128xi32>
    %c0_i32_13 = arith.constant 0 : i32
    %30 = vector.broadcast %c0_i32_13 : i32 to vector<6x8x128xi32>
    %31 = arith.cmpi sge, %29, %30 : vector<6x8x128xi32>
    %c8_i32 = arith.constant 8 : i32
    %32 = vector.broadcast %c8_i32 : i32 to vector<6x8x128xi32>
    %33 = arith.cmpi slt, %29, %32 : vector<6x8x128xi32>
    %34 = arith.andi %31, %33 : vector<6x8x128xi1>
    %cst_14 = arith.constant 0.000000e+00 : f32
    %35 = vector.broadcast %cst_14 : f32 to vector<6x8x128xf32>
    %36 = arith.select %34, %26, %35 : vector<6x8x128xi1>, vector<6x8x128xf32>
    %37 = arith.truncf %36 : vector<6x8x128xf32> to vector<6x8x128xbf16>
    %38 = vector.extract_strided_slice %16 {offsets = [0, 128], sizes = [48, 128], strides = [1, 1]} : vector<48x256xf32> to vector<48x128xf32>
    %c0_15 = arith.constant 0 : index
    %c0_16 = arith.constant 0 : index
    %39 = vector.load %arg4[%c0_15, %c0_16] : memref<1x128xf32, #tpu.memory_space<vmem>>, vector<1x128xf32>
    %40 = vector.broadcast %39 : vector<1x128xf32> to vector<48x128xf32>
    %41 = arith.addf %38, %40 : vector<48x128xf32>
    %42 = vector.shape_cast %41 : vector<48x128xf32> to vector<6x8x128xf32>
    %43 = vector.extract_strided_slice %42 {offsets = [1, 0, 0], sizes = [4, 8, 128], strides = [1, 1, 1]} : vector<6x8x128xf32> to vector<4x8x128xf32>
    %44 = vector.shape_cast %43 : vector<4x8x128xf32> to vector<32x128xf32>
    %cst_17 = arith.constant 0.000000e+00 : bf16
    %45 = vector.broadcast %cst_17 : bf16 to vector<6x1x128xbf16>
    %46 = tpu.concatenate %45, %37, %45 in 1 : vector<6x1x128xbf16>, vector<6x8x128xbf16>, vector<6x1x128xbf16> -> vector<6x10x128xbf16>
    %cst_18 = arith.constant 0.000000e+00 : f32
    %47 = vector.broadcast %cst_18 : f32 to vector<32x128xf32>
    %c0_19 = arith.constant 0 : index
    %c0_20 = arith.constant 0 : index
    %48 = vector.load %arg6[%c0_19, %c0_20] : memref<1x128xf32, #tpu.memory_space<vmem>>, vector<1x128xf32>
    %49 = vector.broadcast %48 : vector<1x128xf32> to vector<32x128xf32>
    %50 = arith.addf %47, %49 : vector<32x128xf32>
    %51 = vector.extract_strided_slice %46 {offsets = [0, 0, 0], sizes = [4, 8, 128], strides = [1, 1, 1]} : vector<6x10x128xbf16> to vector<4x8x128xbf16>
    %52 = vector.shape_cast %51 : vector<4x8x128xbf16> to vector<32x128xbf16>
    %c0_21 = arith.constant 0 : index
    %c0_22 = arith.constant 0 : index
    %c0_23 = arith.constant 0 : index
    %53 = vector.load %arg5[%c0_21, %c0_22, %c0_23] : memref<9x128x128xbf16, #tpu.memory_space<vmem>>, vector<1x128x128xbf16>
    %54 = vector.shape_cast %53 : vector<1x128x128xbf16> to vector<128x128xbf16>
    %cst_24 = arith.constant dense<0.000000e+00> : vector<32x128xf32>
    %55 = tpu.matmul %52, %54, %cst_24 {dimension_numbers = #tpu.dot_dimension_numbers<[1], [0], [0], [1], [0, 0, 1, 1], [], []>} : vector<32x128xbf16>, vector<128x128xbf16>, vector<32x128xf32> -> vector<32x128xf32>
    %56 = arith.addf %50, %55 : vector<32x128xf32>
    %57 = vector.extract_strided_slice %46 {offsets = [0, 1, 0], sizes = [4, 8, 128], strides = [1, 1, 1]} : vector<6x10x128xbf16> to vector<4x8x128xbf16>
    %58 = vector.shape_cast %57 : vector<4x8x128xbf16> to vector<32x128xbf16>
    %c1 = arith.constant 1 : index
    %c0_25 = arith.constant 0 : index
    %c0_26 = arith.constant 0 : index
    %59 = vector.load %arg5[%c1, %c0_25, %c0_26] : memref<9x128x128xbf16, #tpu.memory_space<vmem>>, vector<1x128x128xbf16>
    %60 = vector.shape_cast %59 : vector<1x128x128xbf16> to vector<128x128xbf16>
    %cst_27 = arith.constant dense<0.000000e+00> : vector<32x128xf32>
    %61 = tpu.matmul %58, %60, %cst_27 {dimension_numbers = #tpu.dot_dimension_numbers<[1], [0], [0], [1], [0, 0, 1, 1], [], []>} : vector<32x128xbf16>, vector<128x128xbf16>, vector<32x128xf32> -> vector<32x128xf32>
    %62 = arith.addf %56, %61 : vector<32x128xf32>
    %63 = vector.extract_strided_slice %46 {offsets = [0, 2, 0], sizes = [4, 8, 128], strides = [1, 1, 1]} : vector<6x10x128xbf16> to vector<4x8x128xbf16>
    %64 = vector.shape_cast %63 : vector<4x8x128xbf16> to vector<32x128xbf16>
    %c2 = arith.constant 2 : index
    %c0_28 = arith.constant 0 : index
    %c0_29 = arith.constant 0 : index
    %65 = vector.load %arg5[%c2, %c0_28, %c0_29] : memref<9x128x128xbf16, #tpu.memory_space<vmem>>, vector<1x128x128xbf16>
    %66 = vector.shape_cast %65 : vector<1x128x128xbf16> to vector<128x128xbf16>
    %cst_30 = arith.constant dense<0.000000e+00> : vector<32x128xf32>
    %67 = tpu.matmul %64, %66, %cst_30 {dimension_numbers = #tpu.dot_dimension_numbers<[1], [0], [0], [1], [0, 0, 1, 1], [], []>} : vector<32x128xbf16>, vector<128x128xbf16>, vector<32x128xf32> -> vector<32x128xf32>
    %68 = arith.addf %62, %67 : vector<32x128xf32>
    %69 = vector.extract_strided_slice %46 {offsets = [1, 0, 0], sizes = [4, 8, 128], strides = [1, 1, 1]} : vector<6x10x128xbf16> to vector<4x8x128xbf16>
    %70 = vector.shape_cast %69 : vector<4x8x128xbf16> to vector<32x128xbf16>
    %c3 = arith.constant 3 : index
    %c0_31 = arith.constant 0 : index
    %c0_32 = arith.constant 0 : index
    %71 = vector.load %arg5[%c3, %c0_31, %c0_32] : memref<9x128x128xbf16, #tpu.memory_space<vmem>>, vector<1x128x128xbf16>
    %72 = vector.shape_cast %71 : vector<1x128x128xbf16> to vector<128x128xbf16>
    %cst_33 = arith.constant dense<0.000000e+00> : vector<32x128xf32>
    %73 = tpu.matmul %70, %72, %cst_33 {dimension_numbers = #tpu.dot_dimension_numbers<[1], [0], [0], [1], [0, 0, 1, 1], [], []>} : vector<32x128xbf16>, vector<128x128xbf16>, vector<32x128xf32> -> vector<32x128xf32>
    %74 = arith.addf %68, %73 : vector<32x128xf32>
    %75 = vector.extract_strided_slice %46 {offsets = [1, 1, 0], sizes = [4, 8, 128], strides = [1, 1, 1]} : vector<6x10x128xbf16> to vector<4x8x128xbf16>
    %76 = vector.shape_cast %75 : vector<4x8x128xbf16> to vector<32x128xbf16>
    %c4 = arith.constant 4 : index
    %c0_34 = arith.constant 0 : index
    %c0_35 = arith.constant 0 : index
    %77 = vector.load %arg5[%c4, %c0_34, %c0_35] : memref<9x128x128xbf16, #tpu.memory_space<vmem>>, vector<1x128x128xbf16>
    %78 = vector.shape_cast %77 : vector<1x128x128xbf16> to vector<128x128xbf16>
    %cst_36 = arith.constant dense<0.000000e+00> : vector<32x128xf32>
    %79 = tpu.matmul %76, %78, %cst_36 {dimension_numbers = #tpu.dot_dimension_numbers<[1], [0], [0], [1], [0, 0, 1, 1], [], []>} : vector<32x128xbf16>, vector<128x128xbf16>, vector<32x128xf32> -> vector<32x128xf32>
    %80 = arith.addf %74, %79 : vector<32x128xf32>
    %81 = vector.extract_strided_slice %46 {offsets = [1, 2, 0], sizes = [4, 8, 128], strides = [1, 1, 1]} : vector<6x10x128xbf16> to vector<4x8x128xbf16>
    %82 = vector.shape_cast %81 : vector<4x8x128xbf16> to vector<32x128xbf16>
    %c5 = arith.constant 5 : index
    %c0_37 = arith.constant 0 : index
    %c0_38 = arith.constant 0 : index
    %83 = vector.load %arg5[%c5, %c0_37, %c0_38] : memref<9x128x128xbf16, #tpu.memory_space<vmem>>, vector<1x128x128xbf16>
    %84 = vector.shape_cast %83 : vector<1x128x128xbf16> to vector<128x128xbf16>
    %cst_39 = arith.constant dense<0.000000e+00> : vector<32x128xf32>
    %85 = tpu.matmul %82, %84, %cst_39 {dimension_numbers = #tpu.dot_dimension_numbers<[1], [0], [0], [1], [0, 0, 1, 1], [], []>} : vector<32x128xbf16>, vector<128x128xbf16>, vector<32x128xf32> -> vector<32x128xf32>
    %86 = arith.addf %80, %85 : vector<32x128xf32>
    %87 = vector.extract_strided_slice %46 {offsets = [2, 0, 0], sizes = [4, 8, 128], strides = [1, 1, 1]} : vector<6x10x128xbf16> to vector<4x8x128xbf16>
    %88 = vector.shape_cast %87 : vector<4x8x128xbf16> to vector<32x128xbf16>
    %c6 = arith.constant 6 : index
    %c0_40 = arith.constant 0 : index
    %c0_41 = arith.constant 0 : index
    %89 = vector.load %arg5[%c6, %c0_40, %c0_41] : memref<9x128x128xbf16, #tpu.memory_space<vmem>>, vector<1x128x128xbf16>
    %90 = vector.shape_cast %89 : vector<1x128x128xbf16> to vector<128x128xbf16>
    %cst_42 = arith.constant dense<0.000000e+00> : vector<32x128xf32>
    %91 = tpu.matmul %88, %90, %cst_42 {dimension_numbers = #tpu.dot_dimension_numbers<[1], [0], [0], [1], [0, 0, 1, 1], [], []>} : vector<32x128xbf16>, vector<128x128xbf16>, vector<32x128xf32> -> vector<32x128xf32>
    %92 = arith.addf %86, %91 : vector<32x128xf32>
    %93 = vector.extract_strided_slice %46 {offsets = [2, 1, 0], sizes = [4, 8, 128], strides = [1, 1, 1]} : vector<6x10x128xbf16> to vector<4x8x128xbf16>
    %94 = vector.shape_cast %93 : vector<4x8x128xbf16> to vector<32x128xbf16>
    %c7 = arith.constant 7 : index
    %c0_43 = arith.constant 0 : index
    %c0_44 = arith.constant 0 : index
    %95 = vector.load %arg5[%c7, %c0_43, %c0_44] : memref<9x128x128xbf16, #tpu.memory_space<vmem>>, vector<1x128x128xbf16>
    %96 = vector.shape_cast %95 : vector<1x128x128xbf16> to vector<128x128xbf16>
    %cst_45 = arith.constant dense<0.000000e+00> : vector<32x128xf32>
    %97 = tpu.matmul %94, %96, %cst_45 {dimension_numbers = #tpu.dot_dimension_numbers<[1], [0], [0], [1], [0, 0, 1, 1], [], []>} : vector<32x128xbf16>, vector<128x128xbf16>, vector<32x128xf32> -> vector<32x128xf32>
    %98 = arith.addf %92, %97 : vector<32x128xf32>
    %99 = vector.extract_strided_slice %46 {offsets = [2, 2, 0], sizes = [4, 8, 128], strides = [1, 1, 1]} : vector<6x10x128xbf16> to vector<4x8x128xbf16>
    %100 = vector.shape_cast %99 : vector<4x8x128xbf16> to vector<32x128xbf16>
    %c8 = arith.constant 8 : index
    %c0_46 = arith.constant 0 : index
    %c0_47 = arith.constant 0 : index
    %101 = vector.load %arg5[%c8, %c0_46, %c0_47] : memref<9x128x128xbf16, #tpu.memory_space<vmem>>, vector<1x128x128xbf16>
    %102 = vector.shape_cast %101 : vector<1x128x128xbf16> to vector<128x128xbf16>
    %cst_48 = arith.constant dense<0.000000e+00> : vector<32x128xf32>
    %103 = tpu.matmul %100, %102, %cst_48 {dimension_numbers = #tpu.dot_dimension_numbers<[1], [0], [0], [1], [0, 0, 1, 1], [], []>} : vector<32x128xbf16>, vector<128x128xbf16>, vector<32x128xf32> -> vector<32x128xf32>
    %104 = arith.addf %98, %103 : vector<32x128xf32>
    %105 = arith.mulf %104, %104 : vector<32x128xf32>
    %c0_49 = arith.constant 0 : index
    %c0_50 = arith.constant 0 : index
    %106 = vector.load %arg7[%c0_49, %c0_50] : memref<128x128xf32, #tpu.memory_space<vmem>>, vector<128x128xf32>
    %cst_51 = arith.constant dense<0.000000e+00> : vector<32x128xf32>
    %107 = tpu.matmul %105, %106, %cst_51 {dimension_numbers = #tpu.dot_dimension_numbers<[1], [0], [0], [1], [0, 0, 1, 1], [], []>} : vector<32x128xf32>, vector<128x128xf32>, vector<32x128xf32> -> vector<32x128xf32>
    %c0_52 = arith.constant 0 : index
    %c0_53 = arith.constant 0 : index
    %108 = vector.load %arg8[%c0_52, %c0_53] : memref<1x128xf32, #tpu.memory_space<vmem>>, vector<1x128xf32>
    %109 = vector.broadcast %108 : vector<1x128xf32> to vector<32x128xf32>
    %110 = arith.addf %107, %109 : vector<32x128xf32>
    %111 = math.rsqrt %110 : vector<32x128xf32>
    %112 = arith.mulf %104, %111 : vector<32x128xf32>
    %113 = arith.addf %112, %44 : vector<32x128xf32>
    %114 = vector.shape_cast %113 : vector<32x128xf32> to vector<1x4x8x128xf32>
    %c0_54 = arith.constant 0 : index
    %c0_55 = arith.constant 0 : index
    %c0_56 = arith.constant 0 : index
    %c0_57 = arith.constant 0 : index
    %115 = vector.load %arg9[%c0_54, %c0_55, %c0_56, %c0_57] : memref<1x4x8x128xf32, #tpu.memory_space<vmem>>, vector<1x4x8x128xf32>
    tpu.vector_store %arg9[%c0_54, %c0_55, %c0_56, %c0_57], %114 {strides = array<i32>} : memref<1x4x8x128xf32, #tpu.memory_space<vmem>>, vector<1x4x8x128xf32>,
    return
  }
  func.func @transform_0(%arg0: i32) -> (i32, i32, i32, i32) {
    %c0_i32 = arith.constant 0 : i32
    %c0_i32_0 = arith.constant 0 : i32
    %c0_i32_1 = arith.constant 0 : i32
    %c0_i32_2 = arith.constant 0 : i32
    return %arg0, %c0_i32, %c0_i32_0, %c0_i32_1 : i32, i32, i32, i32
  }
  func.func @transform_1(%arg0: i32) -> (i32, i32) {
    %c0_i32 = arith.constant 0 : i32
    %c0_i32_0 = arith.constant 0 : i32
    %c0_i32_1 = arith.constant 0 : i32
    return %c0_i32, %c0_i32_0 : i32, i32
  }
  func.func @transform_2(%arg0: i32) -> (i32, i32) {
    %c0_i32 = arith.constant 0 : i32
    %c0_i32_0 = arith.constant 0 : i32
    %c0_i32_1 = arith.constant 0 : i32
    return %c0_i32, %c0_i32_0 : i32, i32
  }
  func.func @transform_3(%arg0: i32) -> (i32, i32) {
    %c0_i32 = arith.constant 0 : i32
    %c0_i32_0 = arith.constant 0 : i32
    %c0_i32_1 = arith.constant 0 : i32
    return %c0_i32, %c0_i32_0 : i32, i32
  }
  func.func @transform_4(%arg0: i32) -> (i32, i32, i32) {
    %c0_i32 = arith.constant 0 : i32
    %c0_i32_0 = arith.constant 0 : i32
    %c0_i32_1 = arith.constant 0 : i32
    %c0_i32_2 = arith.constant 0 : i32
    return %c0_i32, %c0_i32_0, %c0_i32_1 : i32, i32, i32
  }
  func.func @transform_5(%arg0: i32) -> (i32, i32) {
    %c0_i32 = arith.constant 0 : i32
    %c0_i32_0 = arith.constant 0 : i32
    %c0_i32_1 = arith.constant 0 : i32
    return %c0_i32, %c0_i32_0 : i32, i32
  }
  func.func @transform_6(%arg0: i32) -> (i32, i32) {
    %c0_i32 = arith.constant 0 : i32
    %c0_i32_0 = arith.constant 0 : i32
    %c0_i32_1 = arith.constant 0 : i32
    return %c0_i32, %c0_i32_0 : i32, i32
  }
  func.func @transform_7(%arg0: i32) -> (i32, i32) {
    %c0_i32 = arith.constant 0 : i32
    %c0_i32_0 = arith.constant 0 : i32
    %c0_i32_1 = arith.constant 0 : i32
    return %c0_i32, %c0_i32_0 : i32, i32
  }
  func.func @transform_8(%arg0: i32) -> (i32, i32, i32, i32) {
    %c0_i32 = arith.constant 0 : i32
    %c0_i32_0 = arith.constant 0 : i32
    %c0_i32_1 = arith.constant 0 : i32
    %c0_i32_2 = arith.constant 0 : i32
    return %arg0, %c0_i32, %c0_i32_0, %c0_i32_1 : i32, i32, i32, i32
  }
}

</mosaic_0001>

<llo_original>
// kernel: residual_block_with_stride.1
$region0: #{residual_block_with_stride.1}
  #allocation0 [shape = 'u32[]', space=smem, size = 0x4, offset = 0x4, fixed_abs, tag = 'smem constant byte address 0x4 - core index']
  #allocation1 [shape = 'u32[144,128]{1,0:T(1,128)}', space=vmem, size = 0x12000, scoped, tag = 'internal scratch']
  %s0 = inlined_call_operand.vmem [shape: bf16[4,6,8,128], index: 0, kind: input, shape index: {}]
  %s1 = inlined_call_operand.vmem [shape: bf16[128,256], index: 1, kind: input, shape index: {}]
  %s2 = inlined_call_operand.vmem [shape: f32[1,128], index: 2, kind: input, shape index: {}]
  %s3 = inlined_call_operand.vmem [shape: f32[1,128], index: 3, kind: input, shape index: {}]
  %s4 = inlined_call_operand.vmem [shape: bf16[9,128,128], index: 4, kind: input, shape index: {}]
  %s5 = inlined_call_operand.vmem [shape: f32[1,128], index: 5, kind: input, shape index: {}]
  %s6 = inlined_call_operand.vmem [shape: f32[128,128], index: 6, kind: input, shape index: {}]
  %s7 = inlined_call_operand.vmem [shape: f32[1,128], index: 7, kind: input, shape index: {}]
  %s8 = inlined_call_operand.vmem [shape: f32[4,4,8,128], index: 8, kind: output, shape index: {}]
  %s9 = sld [smem:[#allocation0]]
  $region65: #{residual_block_with_stride.1} parent=0
    _
  %s11 = ssub.s32 1, %s9
  %s12 = scalar_select 0, %s11, %s9
  loop: start=0, step=1, limit=6
  $region2: #{residual_block_with_stride.1} parent=0 // loop_pre_header
    _
  $region3: #{residual_block_with_stride.1} parent=0 // loop_header
    %s14 = sphi 0, %s18
    %p15 = scmp.ge.s32.totalorder %s14, 6
    %s24 = sphi 0, %s26
    %s27 = sphi 0, %s24
    %s28 = sphi 0, %s27
    %s44 = sphi 0, %s28
    %s48 = sphi 0, %s48
    %s50 = sphi 0, %s48
    %s51 = sphi 0, %s50
    %s65 = sphi 0, %s51
    %s69 = sphi 0, %s69
    %s71 = sphi 0, %s69
    %s72 = sphi 0, %s71
    %s86 = sphi 0, %s72
    %s90 = sphi 0, %s90
    %s92 = sphi 0, %s90
    %s93 = sphi 0, %s92
    %s107 = sphi 0, %s93
    %s111 = sphi 0, %s111
    %s113 = sphi 0, %s111
    %s114 = sphi 0, %s113
    %s128 = sphi 0, %s114
    %s132 = sphi 0, %s132
    %s134 = sphi 0, %s132
    %s135 = sphi 0, %s134
    %s149 = sphi 0, %s135
    %s153 = sphi 0, %s153
    %s155 = sphi 0, %s153
    %s156 = sphi 0, %s155
    %s170 = sphi 0, %s156
    %s174 = sphi 0, %s174
    %s176 = sphi 0, %s174
    %s177 = sphi 0, %s176
    %s191 = sphi 0, %s177
    %s197 = sphi 0, %s199
    %s200 = sphi 0, %s197
    %s201 = sphi 0, %s200
    %s217 = sphi 0, %s201
  $region4: #{residual_block_with_stride.1} parent=0 // loop_header_branch
    %17 = sbr.rel (%p15) target = $region8
  $region5: #{residual_block_with_stride.1} parent=0 // loop_body
    %s19 = ssub.s32 %s14, 1
    %s20 = ssub.s32 %s14, 2
    %s21 = sadd.s32 %s14, 1
    %s22 = ssub.s32 %s14, %s21
    %p23 = scmp.eq.s32.totalorder %s22, 0
    %s25 = sadd.s32 %s24, 1
    %s26 = scalar_select %p23, %s24, %s25
    %p29 = pneg %p23
    %p30 = scmp.eq.s32.totalorder %s14, 3
    %p31 = por %p29, %p30
    %p32 = scmp.ne.s32.totalorder %s24, %s27
    %p33 = scmp.eq.s32.totalorder %s14, 0
    %p34 = por %p32, %p33
    %p35 = scmp.ne.s32.totalorder %s24, %s27
    %p36 = scmp.eq.s32.totalorder %s19, 3
    %p37 = por %p35, %p36
    %p38 = scmp.ne.s32.totalorder %s27, %s28
    %p39 = scmp.eq.s32.totalorder %s19, 0
    %p40 = por %p38, %p39
    %p41 = scmp.ne.s32.totalorder %s27, %s28
    %p42 = scmp.eq.s32.totalorder %s20, 3
    %p43 = por %p41, %p42
    %p45 = scmp.ne.s32.totalorder %s28, %s44
    %p46 = scmp.eq.s32.totalorder %s20, 0
    %p47 = por %p45, %p46
    %s49 = sadd.s32 %s48, 1
    %p52 = scmp.eq.s32.totalorder %s14, 3
    %p53 = scmp.ne.s32.totalorder %s48, %s50
    %p54 = scmp.eq.s32.totalorder %s14, 0
    %p55 = por %p53, %p54
    %p56 = scmp.ne.s32.totalorder %s48, %s50
    %p57 = scmp.eq.s32.totalorder %s19, 3
    %p58 = por %p56, %p57
    %p59 = scmp.ne.s32.totalorder %s50, %s51
    %p60 = scmp.eq.s32.totalorder %s19, 0
    %p61 = por %p59, %p60
    %p62 = scmp.ne.s32.totalorder %s50, %s51
    %p63 = scmp.eq.s32.totalorder %s20, 3
    %p64 = por %p62, %p63
    %p66 = scmp.ne.s32.totalorder %s51, %s65
    %p67 = scmp.eq.s32.totalorder %s20, 0
    %p68 = por %p66, %p67
    %s70 = sadd.s32 %s69, 1
    %p73 = scmp.eq.s32.totalorder %s14, 3
    %p74 = scmp.ne.s32.totalorder %s69, %s71
    %p75 = scmp.eq.s32.totalorder %s14, 0
    %p76 = por %p74, %p75
    %p77 = scmp.ne.s32.totalorder %s69, %s71
    %p78 = scmp.eq.s32.totalorder %s19, 3
    %p79 = por %p77, %p78
    %p80 = scmp.ne.s32.totalorder %s71, %s72
    %p81 = scmp.eq.s32.totalorder %s19, 0
    %p82 = por %p80, %p81
    %p83 = scmp.ne.s32.totalorder %s71, %s72
    %p84 = scmp.eq.s32.totalorder %s20, 3
    %p85 = por %p83, %p84
    %p87 = scmp.ne.s32.totalorder %s72, %s86
    %p88 = scmp.eq.s32.totalorder %s20, 0
    %p89 = por %p87, %p88
    %s91 = sadd.s32 %s90, 1
    %p94 = scmp.eq.s32.totalorder %s14, 3
    %p95 = scmp.ne.s32.totalorder %s90, %s92
    %p96 = scmp.eq.s32.totalorder %s14, 0
    %p97 = por %p95, %p96
    %p98 = scmp.ne.s32.totalorder %s90, %s92
    %p99 = scmp.eq.s32.totalorder %s19, 3
    %p100 = por %p98, %p99
    %p101 = scmp.ne.s32.totalorder %s92, %s93
    %p102 = scmp.eq.s32.totalorder %s19, 0
    %p103 = por %p101, %p102
    %p104 = scmp.ne.s32.totalorder %s92, %s93
    %p105 = scmp.eq.s32.totalorder %s20, 3
    %p106 = por %p104, %p105
    %p108 = scmp.ne.s32.totalorder %s93, %s107
    %p109 = scmp.eq.s32.totalorder %s20, 0
    %p110 = por %p108, %p109
    %s112 = sadd.s32 %s111, 1
    %p115 = scmp.eq.s32.totalorder %s14, 3
    %p116 = scmp.ne.s32.totalorder %s111, %s113
    %p117 = scmp.eq.s32.totalorder %s14, 0
    %p118 = por %p116, %p117
    %p119 = scmp.ne.s32.totalorder %s111, %s113
    %p120 = scmp.eq.s32.totalorder %s19, 3
    %p121 = por %p119, %p120
    %p122 = scmp.ne.s32.totalorder %s113, %s114
    %p123 = scmp.eq.s32.totalorder %s19, 0
    %p124 = por %p122, %p123
    %p125 = scmp.ne.s32.totalorder %s113, %s114
    %p126 = scmp.eq.s32.totalorder %s20, 3
    %p127 = por %p125, %p126
    %p129 = scmp.ne.s32.totalorder %s114, %s128
    %p130 = scmp.eq.s32.totalorder %s20, 0
    %p131 = por %p129, %p130
    %s133 = sadd.s32 %s132, 1
    %p136 = scmp.eq.s32.totalorder %s14, 3
    %p137 = scmp.ne.s32.totalorder %s132, %s134
    %p138 = scmp.eq.s32.totalorder %s14, 0
    %p139 = por %p137, %p138
    %p140 = scmp.ne.s32.totalorder %s132, %s134
    %p141 = scmp.eq.s32.totalorder %s19, 3
    %p142 = por %p140, %p141
    %p143 = scmp.ne.s32.totalorder %s134, %s135
    %p144 = scmp.eq.s32.totalorder %s19, 0
    %p145 = por %p143, %p144
    %p146 = scmp.ne.s32.totalorder %s134, %s135
    %p147 = scmp.eq.s32.totalorder %s20, 3
    %p148 = por %p146, %p147
    %p150 = scmp.ne.s32.totalorder %s135, %s149
    %p151 = scmp.eq.s32.totalorder %s20, 0
    %p152 = por %p150, %p151
    %s154 = sadd.s32 %s153, 1
    %p157 = scmp.eq.s32.totalorder %s14, 3
    %p158 = scmp.ne.s32.totalorder %s153, %s155
    %p159 = scmp.eq.s32.totalorder %s14, 0
    %p160 = por %p158, %p159
    %p161 = scmp.ne.s32.totalorder %s153, %s155
    %p162 = scmp.eq.s32.totalorder %s19, 3
    %p163 = por %p161, %p162
    %p164 = scmp.ne.s32.totalorder %s155, %s156
    %p165 = scmp.eq.s32.totalorder %s19, 0
    %p166 = por %p164, %p165
    %p167 = scmp.ne.s32.totalorder %s155, %s156
    %p168 = scmp.eq.s32.totalorder %s20, 3
    %p169 = por %p167, %p168
    %p171 = scmp.ne.s32.totalorder %s156, %s170
    %p172 = scmp.eq.s32.totalorder %s20, 0
    %p173 = por %p171, %p172
    %s175 = sadd.s32 %s174, 1
    %p178 = scmp.eq.s32.totalorder %s14, 3
    %p179 = scmp.ne.s32.totalorder %s174, %s176
    %p180 = scmp.eq.s32.totalorder %s14, 0
    %p181 = por %p179, %p180
    %p182 = scmp.ne.s32.totalorder %s174, %s176
    %p183 = scmp.eq.s32.totalorder %s19, 3
    %p184 = por %p182, %p183
    %p185 = scmp.ne.s32.totalorder %s176, %s177
    %p186 = scmp.eq.s32.totalorder %s19, 0
    %p187 = por %p185, %p186
    %p188 = scmp.ne.s32.totalorder %s176, %s177
    %p189 = scmp.eq.s32.totalorder %s20, 3
    %p190 = por %p188, %p189
    %p192 = scmp.ne.s32.totalorder %s177, %s191
    %p193 = scmp.eq.s32.totalorder %s20, 0
    %p194 = por %p192, %p193
    %s195 = ssub.s32 %s14, %s21
    %p196 = scmp.eq.s32.totalorder %s195, 0
    %s198 = sadd.s32 %s197, 1
    %s199 = scalar_select %p196, %s197, %s198
    %p202 = pneg %p196
    %p203 = scmp.eq.s32.totalorder %s14, 3
    %p204 = por %p202, %p203
    %p205 = scmp.ne.s32.totalorder %s197, %s200
    %p206 = scmp.eq.s32.totalorder %s14, 0
    %p207 = por %p205, %p206
    %p208 = scmp.ne.s32.totalorder %s197, %s200
    %p209 = scmp.eq.s32.totalorder %s19, 3
    %p210 = por %p208, %p209
    %p211 = scmp.ne.s32.totalorder %s200, %s201
    %p212 = scmp.eq.s32.totalorder %s19, 0
    %p213 = por %p211, %p212
    %p214 = scmp.ne.s32.totalorder %s200, %s201
    %p215 = scmp.eq.s32.totalorder %s20, 3
    %p216 = por %p214, %p215
    %p218 = scmp.ne.s32.totalorder %s201, %s217
    %p219 = scmp.eq.s32.totalorder %s20, 0
    %p220 = por %p218, %p219
    %p221 = scmp.le.s32.totalorder 1, %s14
    %p222 = scmp.lt.s32.totalorder %s14, 5
    %p223 = pnand %p221, %p222
    %p224 = pneg %p223
    // Predicated region
    $region9: #{residual_block_with_stride.1} parent=5 // pred_check
      _
    $region10: #{residual_block_with_stride.1} parent=5 // pred_check_branch
      %226 = sbr.rel (%p223) target = $region12
    $region11: #{residual_block_with_stride.1} parent=5 // pred_region
      %s227 = ssub.s32 %s14, 1
      // Predicated region
      $region13: #{residual_block_with_stride.1} parent=11 // pred_check
        %p228 = pneg %p61
      $region14: #{residual_block_with_stride.1} parent=11 // pred_check_branch
        %230 = sbr.rel (%p228) target = $region16
      $region15: #{residual_block_with_stride.1} parent=11 // pred_region
        _
      $region16: #{residual_block_with_stride.1} parent=11 // pred_fallthru
        _
      // Predicated region
      $region17: #{residual_block_with_stride.1} parent=11 // pred_check
        %p231 = pneg %p82
      $region18: #{residual_block_with_stride.1} parent=11 // pred_check_branch
        %233 = sbr.rel (%p231) target = $region20
      $region19: #{residual_block_with_stride.1} parent=11 // pred_region
        _
      $region20: #{residual_block_with_stride.1} parent=11 // pred_fallthru
        _
      // Predicated region
      $region21: #{residual_block_with_stride.1} parent=11 // pred_check
        %p234 = pneg %p103
      $region22: #{residual_block_with_stride.1} parent=11 // pred_check_branch
        %236 = sbr.rel (%p234) target = $region24
      $region23: #{residual_block_with_stride.1} parent=11 // pred_region
        _
      $region24: #{residual_block_with_stride.1} parent=11 // pred_fallthru
        _
      // Predicated region
      $region25: #{residual_block_with_stride.1} parent=11 // pred_check
        %p237 = pneg %p124
      $region26: #{residual_block_with_stride.1} parent=11 // pred_check_branch
        %239 = sbr.rel (%p237) target = $region28
      $region27: #{residual_block_with_stride.1} parent=11 // pred_region
        _
      $region28: #{residual_block_with_stride.1} parent=11 // pred_fallthru
        _
      // Predicated region
      $region29: #{residual_block_with_stride.1} parent=11 // pred_check
        %p240 = pneg %p145
      $region30: #{residual_block_with_stride.1} parent=11 // pred_check_branch
        %242 = sbr.rel (%p240) target = $region32
      $region31: #{residual_block_with_stride.1} parent=11 // pred_region
        _
      $region32: #{residual_block_with_stride.1} parent=11 // pred_fallthru
        _
      // Predicated region
      $region33: #{residual_block_with_stride.1} parent=11 // pred_check
        %p243 = pneg %p166
      $region34: #{residual_block_with_stride.1} parent=11 // pred_check_branch
        %245 = sbr.rel (%p243) target = $region36
      $region35: #{residual_block_with_stride.1} parent=11 // pred_region
        _
      $region36: #{residual_block_with_stride.1} parent=11 // pred_fallthru
        _
      // Predicated region
      $region37: #{residual_block_with_stride.1} parent=11 // pred_check
        %p246 = pneg %p187
      $region38: #{residual_block_with_stride.1} parent=11 // pred_check_branch
        %248 = sbr.rel (%p246) target = $region40
      $region39: #{residual_block_with_stride.1} parent=11 // pred_region
        _
      $region40: #{residual_block_with_stride.1} parent=11 // pred_fallthru
        _
    $region12: #{residual_block_with_stride.1} parent=5 // pred_fallthru
      _
    %p249 = scmp.lt.s32.totalorder %s14, 4
    // Predicated region
    $region41: #{residual_block_with_stride.1} parent=5 // pred_check
      %p250 = pneg %p249
    $region42: #{residual_block_with_stride.1} parent=5 // pred_check_branch
      %252 = sbr.rel (%p250) target = $region44
    $region43: #{residual_block_with_stride.1} parent=5 // pred_region
      // Predicated region
      $region45: #{residual_block_with_stride.1} parent=43 // pred_check
        %p253 = pneg %p34
      $region46: #{residual_block_with_stride.1} parent=43 // pred_check_branch
        %255 = sbr.rel (%p253) target = $region48
      $region47: #{residual_block_with_stride.1} parent=43 // pred_region
        %p256 = scmp.lt.s32.totalorder %s14, 3
        %s257 = scalar_select %p256, %s14, 3
        %s258 = smul.addr %s257, 6
        %s259 = smul.addr %s258, 4
        %s260 = scalar_lea.vmem %s0, %s259
      $region48: #{residual_block_with_stride.1} parent=43 // pred_fallthru
        _
    $region44: #{residual_block_with_stride.1} parent=5 // pred_fallthru
      _
    %p261 = scmp.le.s32.totalorder 1, %s14
    %p262 = scmp.lt.s32.totalorder %s14, 5
    %p263 = pnand %p261, %p262
    %p264 = pneg %p263
    // Predicated region
    $region49: #{residual_block_with_stride.1} parent=5 // pred_check
      _
    $region50: #{residual_block_with_stride.1} parent=5 // pred_check_branch
      %266 = sbr.rel (%p263) target = $region52
    $region51: #{residual_block_with_stride.1} parent=5 // pred_region
      %s267 = ssub.s32 %s14, 1
      %p268 = scmp.lt.s32.totalorder %s19, 3
      %s269 = scalar_select %p268, %s19, 3
      %s270 = smul.addr %s269, 6
      %s271 = smul.addr %s270, 4
      %s272 = scalar_lea.vmem %s0, %s271
      %p273 = pneg %p40
      %p274 = pneg %p37
      %p275 = pneg %p61
      %p276 = pneg %p58
      %p277 = pneg %p82
      %p278 = pneg %p79
      %p279 = pneg %p103
      %p280 = pneg %p100
      %p281 = pneg %p124
      %p282 = pneg %p121
      %p283 = pneg %p145
      %p284 = pneg %p142
      %p285 = pneg %p166
      %p286 = pneg %p163
      %p287 = pneg %p187
      %p288 = pneg %p184
      %p289 = pneg %p213
      %p290 = pneg %p210
      %p291 = scmp.lt.s32.totalorder %s19, 3
      %s292 = scalar_select %p291, %s19, 3
      %s293 = smul.addr %s292, 4
      %s294 = smul.addr %s293, 8
      %s295 = scalar_lea.vmem %s8, %s294
      %p296 = scmp.lt.s32.totalorder %s19, 3
      %s297 = scalar_select %p296, %s19, 3
      %s298 = smul.addr %s297, 6
      %s299 = smul.addr %s298, 4
      %s300 = scalar_lea.vmem %s0, %s299
      %p301 = scmp.lt.s32.totalorder %s19, 3
      %s302 = scalar_select %p301, %s19, 3
      %s303 = smul.addr %s302, 4
      %s304 = smul.addr %s303, 8
      %s305 = scalar_lea.vmem %s8, %s304
      %p307 = scmp.lt.s32.totalorder %s19, 0
      %s308 = ssub.s32 0, %s19
      %s309 = scalar_select %p307, %s308, %s19
      %s310 = sand.u32 %s309, 1
      %s311 = ssub.s32 0, %s310
      %s312 = scalar_select %p307, %s311, %s310
      %p313 = scmp.ne.s32.totalorder %s312, 0
      %p314 = scmp.lt.s32.totalorder %s312, 0
      %p315 = pnand %p314, %p313
      %p316 = pneg %p315
      %s317 = sadd.s32 %s312, 2
      %s318 = scalar_select %p316, %s317, %s312
      %s319 = smul.u32 %s318, 4
      %s320 = ssub.s32 %s319, 1
      %v321 = vld [vmem:[%s300] sm:$0xf]
      %v322 = vld [vmem:[%s300 + $0x4] sm:$0xf]
      %v323 = vld [vmem:[%s300 + $0x8] sm:$0xf]
      %v324 = vld [vmem:[%s300 + $0xc] sm:$0xf]
      %v325 = vld [vmem:[%s300 + $0x10] sm:$0xf]
      %v326 = vld [vmem:[%s300 + $0x14] sm:$0xf]
      %v327 = vld [vmem:[%s1] sm:$0xff]
      %v328 = vld [vmem:[%s1 + $0x8] sm:$0xff]
      %v329 = vld [vmem:[%s1 + $0x10] sm:$0xff]
      %v330 = vld [vmem:[%s1 + $0x18] sm:$0xff]
      %v331 = vld [vmem:[%s1 + $0x20] sm:$0xff]
      %v332 = vld [vmem:[%s1 + $0x28] sm:$0xff]
      %v333 = vld [vmem:[%s1 + $0x30] sm:$0xff]
      %v334 = vld [vmem:[%s1 + $0x38] sm:$0xff]
      %v335 = vld [vmem:[%s1 + $0x40] sm:$0xff]
      %v336 = vld [vmem:[%s1 + $0x48] sm:$0xff]
      %v337 = vld [vmem:[%s1 + $0x50] sm:$0xff]
      %v338 = vld [vmem:[%s1 + $0x58] sm:$0xff]
      %v339 = vld [vmem:[%s1 + $0x60] sm:$0xff]
      %v340 = vld [vmem:[%s1 + $0x68] sm:$0xff]
      %v341 = vld [vmem:[%s1 + $0x70] sm:$0xff]
      %v342 = vld [vmem:[%s1 + $0x78] sm:$0xff]
      %v349 = vunpack.c.l.b16 %v321
      %v350 = vunpack.c.l.b16 %v322
      %v351 = vunpack.c.l.b16 %v323
      %v352 = vunpack.c.l.b16 %v324
      %v353 = vunpack.c.l.b16 %v325
      %v354 = vunpack.c.l.b16 %v326
      %v355 = vpack.c.b16 %v350, %v349
      %v356 = vpack.c.b16 %v352, %v351
      %v357 = vpack.c.b16 %v354, %v353
      %v377 = vunpack.c.l.b16 %v327
      %v378 = vunpack.c.h.b16 %v327
      %v379 = vunpack.c.l.b16 %v328
      %v380 = vunpack.c.h.b16 %v328
      %v381 = vunpack.c.l.b16 %v329
      %v382 = vunpack.c.h.b16 %v329
      %v383 = vunpack.c.l.b16 %v330
      %v384 = vunpack.c.h.b16 %v330
      %v385 = vunpack.c.l.b16 %v331
      %v386 = vunpack.c.h.b16 %v331
      %v387 = vunpack.c.l.b16 %v332
      %v388 = vunpack.c.h.b16 %v332
      %v389 = vunpack.c.l.b16 %v333
      %v390 = vunpack.c.h.b16 %v333
      %v391 = vunpack.c.l.b16 %v334
      %v392 = vunpack.c.h.b16 %v334
      %v393 = vunpack.c.l.b16 %v335
      %v394 = vunpack.c.h.b16 %v335
      %v395 = vunpack.c.l.b16 %v336
      %v396 = vunpack.c.h.b16 %v336
      %v397 = vunpack.c.l.b16 %v337
      %v398 = vunpack.c.h.b16 %v337
      %v399 = vunpack.c.l.b16 %v338
      %v400 = vunpack.c.h.b16 %v338
      %v401 = vunpack.c.l.b16 %v339
      %v402 = vunpack.c.h.b16 %v339
      %v403 = vunpack.c.l.b16 %v340
      %v404 = vunpack.c.h.b16 %v340
      %v405 = vunpack.c.l.b16 %v341
      %v406 = vunpack.c.h.b16 %v341
      %v407 = vunpack.c.l.b16 %v342
      %v408 = vunpack.c.h.b16 %v342
      %v409 = vpack.c.b16 %v379, %v377
      %v410 = vpack.c.b16 %v380, %v378
      %v411 = vpack.c.b16 %v383, %v381
      %v412 = vpack.c.b16 %v384, %v382
      %v413 = vpack.c.b16 %v387, %v385
      %v414 = vpack.c.b16 %v388, %v386
      %v415 = vpack.c.b16 %v391, %v389
      %v416 = vpack.c.b16 %v392, %v390
      %v417 = vpack.c.b16 %v395, %v393
      %v418 = vpack.c.b16 %v396, %v394
      %v419 = vpack.c.b16 %v399, %v397
      %v420 = vpack.c.b16 %v400, %v398
      %v421 = vpack.c.b16 %v403, %v401
      %v422 = vpack.c.b16 %v404, %v402
      %v423 = vpack.c.b16 %v407, %v405
      %v424 = vpack.c.b16 %v408, %v406
      %441 = vmatprep.subr.bf16.mxu0 %v424
      %442 = vmatpush1.bf16.msra.mxu0 %v423
      %443 = vmatprep.subr.bf16.mxu0 %v422
      %444 = vmatpush1.bf16.msra.mxu0 %v421
      %445 = vmatprep.subr.bf16.mxu0 %v420
      %446 = vmatpush1.bf16.msra.mxu0 %v419
      %447 = vmatprep.subr.bf16.mxu0 %v418
      %448 = vmatpush1.bf16.msra.mxu0 %v417
      %449 = vmatprep.subr.bf16.mxu0 %v416
      %450 = vmatpush1.bf16.msra.mxu0 %v415
      %451 = vmatprep.subr.bf16.mxu0 %v414
      %452 = vmatpush1.bf16.msra.mxu0 %v413
      %453 = vmatprep.subr.bf16.mxu0 %v412
      %454 = vmatpush1.bf16.msra.mxu0 %v411
      %455 = vmatprep.subr.bf16.mxu0 %v410
      %456 = vmatpush1.bf16.msra.mxu0 %v409
      %457 = vmatprep.subr.bf16.mxu0 0
      %458 = vmatpush2.bf16.msra.mxu0 0
      %459 = vmatprep.subr.bf16.mxu0 0
      %460 = vmatpush2.bf16.msra.mxu0 0
      %461 = vmatprep.subr.bf16.mxu0 0
      %462 = vmatpush2.bf16.msra.mxu0 0
      %463 = vmatprep.subr.bf16.mxu0 0
      %464 = vmatpush2.bf16.msra.mxu0 0
      %465 = vmatprep.subr.bf16.mxu0 0
      %466 = vmatpush2.bf16.msra.mxu0 0
      %467 = vmatprep.subr.bf16.mxu0 0
      %468 = vmatpush2.bf16.msra.mxu0 0
      %469 = vmatprep.subr.bf16.mxu0 0
      %470 = vmatpush2.bf16.msra.mxu0 0
      %471 = vmatprep.subr.bf16.mxu0 0
      %472 = vmatpush2.bf16.msra.mxu0 0
      %473 = vmatprep.mubr.bf16.mxu0 0
      %474 = vmatmul.mubr.bf16.gmra.mxu0 %v355
      %v475 = vpop.f32.mrf.mxu0
      %v476 = vadd.f32 0.0, %v475
      %v477 = vpop.f32.mrf.mxu0
      %v478 = vpop.f32.mrf.mxu0
      %v479 = vadd.f32 0.0, %v478
      %v480 = vpop.f32.mrf.mxu0
      %v481 = vadd.f32 0.0, %v480
      %482 = vmatprep.mubr.bf16.mxu0 0
      %483 = vmatmul.mubr.bf16.gmra.mxu0 %v356
      %v484 = vpop.f32.mrf.mxu0
      %v485 = vadd.f32 0.0, %v484
      %v486 = vpop.f32.mrf.mxu0
      %v487 = vadd.f32 0.0, %v486
      %v488 = vpop.f32.mrf.mxu0
      %v489 = vadd.f32 0.0, %v488
      %v490 = vpop.f32.mrf.mxu0
      %v491 = vadd.f32 0.0, %v490
      %492 = vmatprep.mubr.bf16.mxu0 0
      %493 = vmatmul.mubr.bf16.gmra.mxu0 %v357
      %v494 = vpop.f32.mrf.mxu0
      %v495 = vadd.f32 0.0, %v494
      %v496 = vpop.f32.mrf.mxu0
      %v497 = vadd.f32 0.0, %v496
      %v498 = vpop.f32.mrf.mxu0
      %v499 = vadd.f32 0.0, %v498
      %v500 = vpop.f32.mrf.mxu0
      %501 = vdwg.mxu0
      %v502 = vld [vmem:[%s2] sm:$0x1]
      %v504 = vlaneseq
      %v505 = vshrl.u32 %v504, 7
      %v506 = vsub.s32 0, %v505
      %v507 = vrot.slane %v502, %v506
      %v509 = vadd.f32 %v476, %v507
      %v510 = vadd.f32 %v479, %v507
      %v511 = vadd.f32 %v485, %v507
      %v512 = vadd.f32 %v489, %v507
      %v513 = vadd.f32 %v495, %v507
      %v514 = vadd.f32 %v499, %v507
      %vm515 = vcmp.ge.f32.partialorder %v509, 0.0
      %vm516 = vcmp.ge.f32.partialorder %v510, 0.0
      %vm517 = vcmp.ge.f32.partialorder %v511, 0.0
      %vm518 = vcmp.ge.f32.partialorder %v512, 0.0
      %vm519 = vcmp.ge.f32.partialorder %v513, 0.0
      %vm520 = vcmp.ge.f32.partialorder %v514, 0.0
      %v521 = vmul.f32 %v509, 0.01
      %v522 = vmul.f32 %v510, 0.01
      %v523 = vmul.f32 %v511, 0.01
      %v524 = vmul.f32 %v512, 0.01
      %v525 = vmul.f32 %v513, 0.01
      %v526 = vmul.f32 %v514, 0.01
      %v527 = vsel %vm515, %v509, %v521
      %v528 = vsel %vm516, %v510, %v522
      %v529 = vsel %vm517, %v511, %v523
      %v530 = vsel %vm518, %v512, %v524
      %v531 = vsel %vm519, %v513, %v525
      %v532 = vsel %vm520, %v514, %v526
      %v533 = vstv %s320
      %v534 = vadd.s32 %v533, 1
      %v535 = vadd.s32 %v533, 2
      %v536 = vadd.s32 %v533, 3
      %v537 = vadd.s32 %v533, 4
      %v538 = vadd.s32 %v533, 5
      %vm539 = vcmp.ge.s32.totalorder %v533, 0
      %vm540 = vcmp.ge.s32.totalorder %v534, 0
      %vm541 = vcmp.ge.s32.totalorder %v535, 0
      %vm542 = vcmp.ge.s32.totalorder %v536, 0
      %vm543 = vcmp.ge.s32.totalorder %v537, 0
      %vm544 = vcmp.ge.s32.totalorder %v538, 0
      %vm545 = vcmp.lt.s32.totalorder %v533, 8
      %vm546 = vcmp.lt.s32.totalorder %v534, 8
      %vm547 = vcmp.lt.s32.totalorder %v535, 8
      %vm548 = vcmp.lt.s32.totalorder %v536, 8
      %vm549 = vcmp.lt.s32.totalorder %v537, 8
      %vm550 = vcmp.lt.s32.totalorder %v538, 8
      %vm551 = vmand %vm539, %vm545
      %vm552 = vmand %vm540, %vm546
      %vm553 = vmand %vm541, %vm547
      %vm554 = vmand %vm542, %vm548
      %vm555 = vmand %vm543, %vm549
      %vm556 = vmand %vm544, %vm550
      %v557 = vsel %vm551, %v527, 0.0
      %v558 = vsel %vm552, %v528, 0.0
      %v559 = vsel %vm553, %v529, 0.0
      %v560 = vsel %vm554, %v530, 0.0
      %v561 = vsel %vm555, %v531, 0.0
      %v562 = vsel %vm556, %v532, 0.0
      %v563 = vpack.c.bf16 %v557, %v557
      %v564 = vpack.c.bf16 %v558, %v558
      %v565 = vpack.c.bf16 %v559, %v559
      %v566 = vpack.c.bf16 %v560, %v560
      %v567 = vpack.c.bf16 %v561, %v561
      %v568 = vpack.c.bf16 %v562, %v562
      %v569 = vld [vmem:[%s3] sm:$0x1]
      %v571 = vlaneseq
      %v572 = vshrl.u32 %v571, 7
      %v573 = vsub.s32 0, %v572
      %v574 = vrot.slane %v569, %v573
      %v576 = vadd.f32 %v481, %v574
      %v577 = vadd.f32 %v487, %v574
      %v578 = vadd.f32 %v491, %v574
      %v579 = vadd.f32 %v497, %v574
      %v581 = vshrl.u32 %v563, 16
      %v583 = vrot.slane %v581, 7
      %v584 = vshll.u32 %v563, 16
      %v586 = vor.u32 %v583, %v584
      %v588 = vshrl.u32 %v564, 16
      %v590 = vrot.slane %v588, 7
      %v591 = vshll.u32 %v564, 16
      %v593 = vor.u32 %v590, %v591
      %v595 = vshrl.u32 %v565, 16
      %v597 = vrot.slane %v595, 7
      %v598 = vshll.u32 %v565, 16
      %v600 = vor.u32 %v597, %v598
      %v602 = vshrl.u32 %v566, 16
      %v604 = vrot.slane %v602, 7
      %v605 = vshll.u32 %v566, 16
      %v607 = vor.u32 %v604, %v605
      %v609 = vshrl.u32 %v567, 16
      %v611 = vrot.slane %v609, 7
      %v612 = vshll.u32 %v567, 16
      %v614 = vor.u32 %v611, %v612
      %v616 = vshrl.u32 %v568, 16
      %v618 = vrot.slane %v616, 7
      %v619 = vshll.u32 %v568, 16
      %v621 = vor.u32 %v618, %v619
      %vm628 = vcmask 1040384
      %vm629 = vsmask.f32 256
      %vm630 = vmand %vm628, %vm629
      %v631 = vsel %vm630, 0, %v586
      %v632 = vsel %vm630, 0, %v593
      %v633 = vsel %vm630, 0, %v600
      %v634 = vsel %vm630, 0, %v607
      %v635 = vsel %vm630, 0, %v614
      %v636 = vsel %vm630, 0, %v621
      %vm637 = vcmask 1044480
      %vm638 = vsmask.f32 4352
      %vm639 = vmand %vm637, %vm638
      %v640 = vsel %vm639, %v631, 0
      %v641 = vsel %vm639, %v632, 0
      %v642 = vsel %vm639, %v633, 0
      %v643 = vsel %vm639, %v634, 0
      %v644 = vsel %vm639, %v635, 0
      %v645 = vsel %vm639, %v636, 0
      %v646 = vld [vmem:[%s5] sm:$0x1]
      %v648 = vlaneseq
      %v649 = vshrl.u32 %v648, 7
      %v650 = vsub.s32 0, %v649
      %v651 = vrot.slane %v646, %v650
      %v653 = vadd.f32 %v651, 0.0
      %v654 = vld [vmem:[%s4] sm:$0xf]
      %v655 = vld [vmem:[%s4 + $0x4] sm:$0xf]
      %v656 = vld [vmem:[%s4 + $0x8] sm:$0xf]
      %v657 = vld [vmem:[%s4 + $0xc] sm:$0xf]
      %v658 = vld [vmem:[%s4 + $0x10] sm:$0xf]
      %v659 = vld [vmem:[%s4 + $0x14] sm:$0xf]
      %v660 = vld [vmem:[%s4 + $0x18] sm:$0xf]
      %v661 = vld [vmem:[%s4 + $0x1c] sm:$0xf]
      %v662 = vld [vmem:[%s4 + $0x20] sm:$0xf]
      %v663 = vld [vmem:[%s4 + $0x24] sm:$0xf]
      %v664 = vld [vmem:[%s4 + $0x28] sm:$0xf]
      %v665 = vld [vmem:[%s4 + $0x2c] sm:$0xf]
      %v666 = vld [vmem:[%s4 + $0x30] sm:$0xf]
      %v667 = vld [vmem:[%s4 + $0x34] sm:$0xf]
      %v668 = vld [vmem:[%s4 + $0x38] sm:$0xf]
      %v669 = vld [vmem:[%s4 + $0x3c] sm:$0xf]
      %v674 = vunpack.c.l.b16 %v640
      %v675 = vunpack.c.l.b16 %v641
      %v676 = vunpack.c.l.b16 %v642
      %v677 = vunpack.c.l.b16 %v643
      %v678 = vpack.c.b16 %v675, %v674
      %v679 = vpack.c.b16 %v677, %v676
      %v698 = vunpack.c.l.b16 %v654
      %v699 = vunpack.c.l.b16 %v655
      %v700 = vunpack.c.l.b16 %v656
      %v701 = vunpack.c.l.b16 %v657
      %v702 = vunpack.c.l.b16 %v658
      %v703 = vunpack.c.l.b16 %v659
      %v704 = vunpack.c.l.b16 %v660
      %v705 = vunpack.c.l.b16 %v661
      %v706 = vunpack.c.l.b16 %v662
      %v707 = vunpack.c.l.b16 %v663
      %v708 = vunpack.c.l.b16 %v664
      %v709 = vunpack.c.l.b16 %v665
      %v710 = vunpack.c.l.b16 %v666
      %v711 = vunpack.c.l.b16 %v667
      %v712 = vunpack.c.l.b16 %v668
      %v713 = vunpack.c.l.b16 %v669
      %v714 = vpack.c.b16 %v699, %v698
      %v715 = vpack.c.b16 %v701, %v700
      %v716 = vpack.c.b16 %v703, %v702
      %v717 = vpack.c.b16 %v705, %v704
      %v718 = vpack.c.b16 %v707, %v706
      %v719 = vpack.c.b16 %v709, %v708
      %v720 = vpack.c.b16 %v711, %v710
      %v721 = vpack.c.b16 %v713, %v712
      %730 = vmatprep.subr.bf16.mxu0 0
      %731 = vmatpush1.bf16.msra.mxu0 %v721
      %732 = vmatprep.subr.bf16.mxu0 0
      %733 = vmatpush1.bf16.msra.mxu0 %v720
      %734 = vmatprep.subr.bf16.mxu0 0
      %735 = vmatpush1.bf16.msra.mxu0 %v719
      %736 = vmatprep.subr.bf16.mxu0 0
      %737 = vmatpush1.bf16.msra.mxu0 %v718
      %738 = vmatprep.subr.bf16.mxu0 0
      %739 = vmatpush1.bf16.msra.mxu0 %v717
      %740 = vmatprep.subr.bf16.mxu0 0
      %741 = vmatpush1.bf16.msra.mxu0 %v716
      %742 = vmatprep.subr.bf16.mxu0 0
      %743 = vmatpush1.bf16.msra.mxu0 %v715
      %744 = vmatprep.subr.bf16.mxu0 0
      %745 = vmatpush1.bf16.msra.mxu0 %v714
      %746 = vmatprep.subr.bf16.mxu0 0
      %747 = vmatpush2.bf16.msra.mxu0 0
      %748 = vmatprep.subr.bf16.mxu0 0
      %749 = vmatpush2.bf16.msra.mxu0 0
      %750 = vmatprep.subr.bf16.mxu0 0
      %751 = vmatpush2.bf16.msra.mxu0 0
      %752 = vmatprep.subr.bf16.mxu0 0
      %753 = vmatpush2.bf16.msra.mxu0 0
      %754 = vmatprep.subr.bf16.mxu0 0
      %755 = vmatpush2.bf16.msra.mxu0 0
      %756 = vmatprep.subr.bf16.mxu0 0
      %757 = vmatpush2.bf16.msra.mxu0 0
      %758 = vmatprep.subr.bf16.mxu0 0
      %759 = vmatpush2.bf16.msra.mxu0 0
      %760 = vmatprep.subr.bf16.mxu0 0
      %761 = vmatpush2.bf16.msra.mxu0 0
      %762 = vmatprep.mubr.bf16.mxu0 0
      %763 = vmatmul.mubr.bf16.gmra.mxu0 %v678
      %v764 = vpop.f32.mrf.mxu0
      %v765 = vadd.f32 0.0, %v764
      %v766 = vpop.f32.mrf.mxu0
      %v767 = vpop.f32.mrf.mxu0
      %v768 = vadd.f32 0.0, %v767
      %v769 = vpop.f32.mrf.mxu0
      %770 = vmatprep.mubr.bf16.mxu0 0
      %771 = vmatmul.mubr.bf16.gmra.mxu0 %v679
      %v772 = vpop.f32.mrf.mxu0
      %v773 = vadd.f32 0.0, %v772
      %v774 = vpop.f32.mrf.mxu0
      %v775 = vpop.f32.mrf.mxu0
      %v776 = vadd.f32 0.0, %v775
      %v777 = vpop.f32.mrf.mxu0
      %778 = vdwg.mxu0
      %v779 = vadd.f32 %v653, %v765
      %v780 = vadd.f32 %v653, %v768
      %v781 = vadd.f32 %v653, %v773
      %v782 = vadd.f32 %v653, %v776
      %v783 = vunpack.c.h.b16 %v640
      %v784 = vunpack.c.h.b16 %v641
      %v785 = vunpack.c.h.b16 %v642
      %v786 = vunpack.c.h.b16 %v643
      %v787 = vpack.c.b16 %v674, %v674
      %v788 = vpack.c.b16 %v783, %v783
      %v789 = vpack.c.b16 %v675, %v675
      %v790 = vpack.c.b16 %v784, %v784
      %v791 = vpack.c.b16 %v676, %v676
      %v792 = vpack.c.b16 %v785, %v785
      %v793 = vpack.c.b16 %v677, %v677
      %v794 = vpack.c.b16 %v786, %v786
      %vm795 = vsmask.f32 3328
      %vm796 = vsmask.f32 7440
      %vm797 = vmor %vm795, %vm796
      %v799 = vshrl.u32 %v787, 16
      %v801 = vrot.slane %v799, 4
      %v802 = vshll.u32 %v787, 16
      %v804 = vrot.slane %v802, 5
      %v805 = vor.u32 %v801, %v804
      %v806 = vrot.slane %v805, 4
      %v808 = vshll.u32 %v788, 16
      %v810 = vrot.slane %v808, 5
      %v811 = vsel %vm797, %v806, %v810
      %v813 = vshrl.u32 %v789, 16
      %v815 = vrot.slane %v813, 4
      %v816 = vshll.u32 %v789, 16
      %v818 = vrot.slane %v816, 5
      %v819 = vor.u32 %v815, %v818
      %v820 = vrot.slane %v819, 4
      %v822 = vshll.u32 %v790, 16
      %v824 = vrot.slane %v822, 5
      %v825 = vsel %vm797, %v820, %v824
      %v827 = vshrl.u32 %v791, 16
      %v829 = vrot.slane %v827, 4
      %v830 = vshll.u32 %v791, 16
      %v832 = vrot.slane %v830, 5
      %v833 = vor.u32 %v829, %v832
      %v834 = vrot.slane %v833, 4
      %v836 = vshll.u32 %v792, 16
      %v838 = vrot.slane %v836, 5
      %v839 = vsel %vm797, %v834, %v838
      %v841 = vshrl.u32 %v793, 16
      %v843 = vrot.slane %v841, 4
      %v844 = vshll.u32 %v793, 16
      %v846 = vrot.slane %v844, 5
      %v847 = vor.u32 %v843, %v846
      %v848 = vrot.slane %v847, 4
      %v850 = vshll.u32 %v794, 16
      %v852 = vrot.slane %v850, 5
      %v853 = vsel %vm797, %v848, %v852
      %s854 = scalar_lea.vmem %s4, 64
      %v855 = vld [vmem:[%s854] sm:$0xf]
      %v856 = vld [vmem:[%s854 + $0x4] sm:$0xf]
      %v857 = vld [vmem:[%s854 + $0x8] sm:$0xf]
      %v858 = vld [vmem:[%s854 + $0xc] sm:$0xf]
      %v859 = vld [vmem:[%s854 + $0x10] sm:$0xf]
      %v860 = vld [vmem:[%s854 + $0x14] sm:$0xf]
      %v861 = vld [vmem:[%s854 + $0x18] sm:$0xf]
      %v862 = vld [vmem:[%s854 + $0x1c] sm:$0xf]
      %v863 = vld [vmem:[%s854 + $0x20] sm:$0xf]
      %v864 = vld [vmem:[%s854 + $0x24] sm:$0xf]
      %v865 = vld [vmem:[%s854 + $0x28] sm:$0xf]
      %v866 = vld [vmem:[%s854 + $0x2c] sm:$0xf]
      %v867 = vld [vmem:[%s854 + $0x30] sm:$0xf]
      %v868 = vld [vmem:[%s854 + $0x34] sm:$0xf]
      %v869 = vld [vmem:[%s854 + $0x38] sm:$0xf]
      %v870 = vld [vmem:[%s854 + $0x3c] sm:$0xf]
      %v871 = vunpack.c.l.b16 %v811
      %v872 = vunpack.c.l.b16 %v825
      %v873 = vunpack.c.l.b16 %v839
      %v874 = vunpack.c.l.b16 %v853
      %v875 = vpack.c.b16 %v872, %v871
      %v876 = vpack.c.b16 %v874, %v873
      %v895 = vunpack.c.l.b16 %v855
      %v896 = vunpack.c.l.b16 %v856
      %v897 = vunpack.c.l.b16 %v857
      %v898 = vunpack.c.l.b16 %v858
      %v899 = vunpack.c.l.b16 %v859
      %v900 = vunpack.c.l.b16 %v860
      %v901 = vunpack.c.l.b16 %v861
      %v902 = vunpack.c.l.b16 %v862
      %v903 = vunpack.c.l.b16 %v863
      %v904 = vunpack.c.l.b16 %v864
      %v905 = vunpack.c.l.b16 %v865
      %v906 = vunpack.c.l.b16 %v866
      %v907 = vunpack.c.l.b16 %v867
      %v908 = vunpack.c.l.b16 %v868
      %v909 = vunpack.c.l.b16 %v869
      %v910 = vunpack.c.l.b16 %v870
      %v911 = vpack.c.b16 %v896, %v895
      %v912 = vpack.c.b16 %v898, %v897
      %v913 = vpack.c.b16 %v900, %v899
      %v914 = vpack.c.b16 %v902, %v901
      %v915 = vpack.c.b16 %v904, %v903
      %v916 = vpack.c.b16 %v906, %v905
      %v917 = vpack.c.b16 %v908, %v907
      %v918 = vpack.c.b16 %v910, %v909
      %927 = vmatprep.subr.bf16.mxu0 0
      %928 = vmatpush1.bf16.msra.mxu0 %v918
      %929 = vmatprep.subr.bf16.mxu0 0
      %930 = vmatpush1.bf16.msra.mxu0 %v917
      %931 = vmatprep.subr.bf16.mxu0 0
      %932 = vmatpush1.bf16.msra.mxu0 %v916
      %933 = vmatprep.subr.bf16.mxu0 0
      %934 = vmatpush1.bf16.msra.mxu0 %v915
      %935 = vmatprep.subr.bf16.mxu0 0
      %936 = vmatpush1.bf16.msra.mxu0 %v914
      %937 = vmatprep.subr.bf16.mxu0 0
      %938 = vmatpush1.bf16.msra.mxu0 %v913
      %939 = vmatprep.subr.bf16.mxu0 0
      %940 = vmatpush1.bf16.msra.mxu0 %v912
      %941 = vmatprep.subr.bf16.mxu0 0
      %942 = vmatpush1.bf16.msra.mxu0 %v911
      %943 = vmatprep.subr.bf16.mxu0 0
      %944 = vmatpush2.bf16.msra.mxu0 0
      %945 = vmatprep.subr.bf16.mxu0 0
      %946 = vmatpush2.bf16.msra.mxu0 0
      %947 = vmatprep.subr.bf16.mxu0 0
      %948 = vmatpush2.bf16.msra.mxu0 0
      %949 = vmatprep.subr.bf16.mxu0 0
      %950 = vmatpush2.bf16.msra.mxu0 0
      %951 = vmatprep.subr.bf16.mxu0 0
      %952 = vmatpush2.bf16.msra.mxu0 0
      %953 = vmatprep.subr.bf16.mxu0 0
      %954 = vmatpush2.bf16.msra.mxu0 0
      %955 = vmatprep.subr.bf16.mxu0 0
      %956 = vmatpush2.bf16.msra.mxu0 0
      %957 = vmatprep.subr.bf16.mxu0 0
      %958 = vmatpush2.bf16.msra.mxu0 0
      %959 = vmatprep.mubr.bf16.mxu0 0
      %960 = vmatmul.mubr.bf16.gmra.mxu0 %v875
      %v961 = vpop.f32.mrf.mxu0
      %v962 = vadd.f32 0.0, %v961
      %v963 = vpop.f32.mrf.mxu0
      %v964 = vpop.f32.mrf.mxu0
      %v965 = vadd.f32 0.0, %v964
      %v966 = vpop.f32.mrf.mxu0
      %967 = vmatprep.mubr.bf16.mxu0 0
      %968 = vmatmul.mubr.bf16.gmra.mxu0 %v876
      %v969 = vpop.f32.mrf.mxu0
      %v970 = vadd.f32 0.0, %v969
      %v971 = vpop.f32.mrf.mxu0
      %v972 = vpop.f32.mrf.mxu0
      %v973 = vadd.f32 0.0, %v972
      %v974 = vpop.f32.mrf.mxu0
      %975 = vdwg.mxu0
      %v976 = vadd.f32 %v779, %v962
      %v977 = vadd.f32 %v780, %v965
      %v978 = vadd.f32 %v781, %v970
      %v979 = vadd.f32 %v782, %v973
      %vm980 = vcmask 1042432
      %vm981 = vcmask 1046532
      %vm982 = vmor %vm980, %vm981
      %v983 = vrot.slane %v787, 5
      %v984 = vrot.slane %v983, 4
      %v985 = vrot.slane %v788, 5
      %v986 = vsel %vm982, %v984, %v985
      %v987 = vrot.slane %v789, 5
      %v988 = vrot.slane %v987, 4
      %v989 = vrot.slane %v790, 5
      %v990 = vsel %vm982, %v988, %v989
      %v991 = vrot.slane %v791, 5
      %v992 = vrot.slane %v991, 4
      %v993 = vrot.slane %v792, 5
      %v994 = vsel %vm982, %v992, %v993
      %v995 = vrot.slane %v793, 5
      %v996 = vrot.slane %v995, 4
      %v997 = vrot.slane %v794, 5
      %v998 = vsel %vm982, %v996, %v997
      %s999 = scalar_lea.vmem %s4, 128
      %v1000 = vld [vmem:[%s999] sm:$0xf]
      %v1001 = vld [vmem:[%s999 + $0x4] sm:$0xf]
      %v1002 = vld [vmem:[%s999 + $0x8] sm:$0xf]
      %v1003 = vld [vmem:[%s999 + $0xc] sm:$0xf]
      %v1004 = vld [vmem:[%s999 + $0x10] sm:$0xf]
      %v1005 = vld [vmem:[%s999 + $0x14] sm:$0xf]
      %v1006 = vld [vmem:[%s999 + $0x18] sm:$0xf]
      %v1007 = vld [vmem:[%s999 + $0x1c] sm:$0xf]
      %v1008 = vld [vmem:[%s999 + $0x20] sm:$0xf]
      %v1009 = vld [vmem:[%s999 + $0x24] sm:$0xf]
      %v1010 = vld [vmem:[%s999 + $0x28] sm:$0xf]
      %v1011 = vld [vmem:[%s999 + $0x2c] sm:$0xf]
      %v1012 = vld [vmem:[%s999 + $0x30] sm:$0xf]
      %v1013 = vld [vmem:[%s999 + $0x34] sm:$0xf]
      %v1014 = vld [vmem:[%s999 + $0x38] sm:$0xf]
      %v1015 = vld [vmem:[%s999 + $0x3c] sm:$0xf]
      %v1016 = vunpack.c.l.b16 %v986
      %v1017 = vunpack.c.l.b16 %v990
      %v1018 = vunpack.c.l.b16 %v994
      %v1019 = vunpack.c.l.b16 %v998
      %v1020 = vpack.c.b16 %v1017, %v1016
      %v1021 = vpack.c.b16 %v1019, %v1018
      %v1040 = vunpack.c.l.b16 %v1000
      %v1041 = vunpack.c.l.b16 %v1001
      %v1042 = vunpack.c.l.b16 %v1002
      %v1043 = vunpack.c.l.b16 %v1003
      %v1044 = vunpack.c.l.b16 %v1004
      %v1045 = vunpack.c.l.b16 %v1005
      %v1046 = vunpack.c.l.b16 %v1006
      %v1047 = vunpack.c.l.b16 %v1007
      %v1048 = vunpack.c.l.b16 %v1008
      %v1049 = vunpack.c.l.b16 %v1009
      %v1050 = vunpack.c.l.b16 %v1010
      %v1051 = vunpack.c.l.b16 %v1011
      %v1052 = vunpack.c.l.b16 %v1012
      %v1053 = vunpack.c.l.b16 %v1013
      %v1054 = vunpack.c.l.b16 %v1014
      %v1055 = vunpack.c.l.b16 %v1015
      %v1056 = vpack.c.b16 %v1041, %v1040
      %v1057 = vpack.c.b16 %v1043, %v1042
      %v1058 = vpack.c.b16 %v1045, %v1044
      %v1059 = vpack.c.b16 %v1047, %v1046
      %v1060 = vpack.c.b16 %v1049, %v1048
      %v1061 = vpack.c.b16 %v1051, %v1050
      %v1062 = vpack.c.b16 %v1053, %v1052
      %v1063 = vpack.c.b16 %v1055, %v1054
      %1072 = vmatprep.subr.bf16.mxu0 0
      %1073 = vmatpush1.bf16.msra.mxu0 %v1063
      %1074 = vmatprep.subr.bf16.mxu0 0
      %1075 = vmatpush1.bf16.msra.mxu0 %v1062
      %1076 = vmatprep.subr.bf16.mxu0 0
      %1077 = vmatpush1.bf16.msra.mxu0 %v1061
      %1078 = vmatprep.subr.bf16.mxu0 0
      %1079 = vmatpush1.bf16.msra.mxu0 %v1060
      %1080 = vmatprep.subr.bf16.mxu0 0
      %1081 = vmatpush1.bf16.msra.mxu0 %v1059
      %1082 = vmatprep.subr.bf16.mxu0 0
      %1083 = vmatpush1.bf16.msra.mxu0 %v1058
      %1084 = vmatprep.subr.bf16.mxu0 0
      %1085 = vmatpush1.bf16.msra.mxu0 %v1057
      %1086 = vmatprep.subr.bf16.mxu0 0
      %1087 = vmatpush1.bf16.msra.mxu0 %v1056
      %1088 = vmatprep.subr.bf16.mxu0 0
      %1089 = vmatpush2.bf16.msra.mxu0 0
      %1090 = vmatprep.subr.bf16.mxu0 0
      %1091 = vmatpush2.bf16.msra.mxu0 0
      %1092 = vmatprep.subr.bf16.mxu0 0
      %1093 = vmatpush2.bf16.msra.mxu0 0
      %1094 = vmatprep.subr.bf16.mxu0 0
      %1095 = vmatpush2.bf16.msra.mxu0 0
      %1096 = vmatprep.subr.bf16.mxu0 0
      %1097 = vmatpush2.bf16.msra.mxu0 0
      %1098 = vmatprep.subr.bf16.mxu0 0
      %1099 = vmatpush2.bf16.msra.mxu0 0
      %1100 = vmatprep.subr.bf16.mxu0 0
      %1101 = vmatpush2.bf16.msra.mxu0 0
      %1102 = vmatprep.subr.bf16.mxu0 0
      %1103 = vmatpush2.bf16.msra.mxu0 0
      %1104 = vmatprep.mubr.bf16.mxu0 0
      %1105 = vmatmul.mubr.bf16.gmra.mxu0 %v1020
      %v1106 = vpop.f32.mrf.mxu0
      %v1107 = vadd.f32 0.0, %v1106
      %v1108 = vpop.f32.mrf.mxu0
      %v1109 = vpop.f32.mrf.mxu0
      %v1110 = vadd.f32 0.0, %v1109
      %v1111 = vpop.f32.mrf.mxu0
      %1112 = vmatprep.mubr.bf16.mxu0 0
      %1113 = vmatmul.mubr.bf16.gmra.mxu0 %v1021
      %v1114 = vpop.f32.mrf.mxu0
      %v1115 = vadd.f32 0.0, %v1114
      %v1116 = vpop.f32.mrf.mxu0
      %v1117 = vpop.f32.mrf.mxu0
      %v1118 = vadd.f32 0.0, %v1117
      %v1119 = vpop.f32.mrf.mxu0
      %1120 = vdwg.mxu0
      %v1121 = vadd.f32 %v976, %v1107
      %v1122 = vadd.f32 %v977, %v1110
      %v1123 = vadd.f32 %v978, %v1115
      %v1124 = vadd.f32 %v979, %v1118
      %s1125 = scalar_lea.vmem %s4, 192
      %v1126 = vld [vmem:[%s1125] sm:$0xf]
      %v1127 = vld [vmem:[%s1125 + $0x4] sm:$0xf]
      %v1128 = vld [vmem:[%s1125 + $0x8] sm:$0xf]
      %v1129 = vld [vmem:[%s1125 + $0xc] sm:$0xf]
      %v1130 = vld [vmem:[%s1125 + $0x10] sm:$0xf]
      %v1131 = vld [vmem:[%s1125 + $0x14] sm:$0xf]
      %v1132 = vld [vmem:[%s1125 + $0x18] sm:$0xf]
      %v1133 = vld [vmem:[%s1125 + $0x1c] sm:$0xf]
      %v1134 = vld [vmem:[%s1125 + $0x20] sm:$0xf]
      %v1135 = vld [vmem:[%s1125 + $0x24] sm:$0xf]
      %v1136 = vld [vmem:[%s1125 + $0x28] sm:$0xf]
      %v1137 = vld [vmem:[%s1125 + $0x2c] sm:$0xf]
      %v1138 = vld [vmem:[%s1125 + $0x30] sm:$0xf]
      %v1139 = vld [vmem:[%s1125 + $0x34] sm:$0xf]
      %v1140 = vld [vmem:[%s1125 + $0x38] sm:$0xf]
      %v1141 = vld [vmem:[%s1125 + $0x3c] sm:$0xf]
      %v1143 = vunpack.c.l.b16 %v644
      %v1144 = vpack.c.b16 %v676, %v675
      %v1145 = vpack.c.b16 %v1143, %v677
      %v1164 = vunpack.c.l.b16 %v1126
      %v1165 = vunpack.c.l.b16 %v1127
      %v1166 = vunpack.c.l.b16 %v1128
      %v1167 = vunpack.c.l.b16 %v1129
      %v1168 = vunpack.c.l.b16 %v1130
      %v1169 = vunpack.c.l.b16 %v1131
      %v1170 = vunpack.c.l.b16 %v1132
      %v1171 = vunpack.c.l.b16 %v1133
      %v1172 = vunpack.c.l.b16 %v1134
      %v1173 = vunpack.c.l.b16 %v1135
      %v1174 = vunpack.c.l.b16 %v1136
      %v1175 = vunpack.c.l.b16 %v1137
      %v1176 = vunpack.c.l.b16 %v1138
      %v1177 = vunpack.c.l.b16 %v1139
      %v1178 = vunpack.c.l.b16 %v1140
      %v1179 = vunpack.c.l.b16 %v1141
      %v1180 = vpack.c.b16 %v1165, %v1164
      %v1181 = vpack.c.b16 %v1167, %v1166
      %v1182 = vpack.c.b16 %v1169, %v1168
      %v1183 = vpack.c.b16 %v1171, %v1170
      %v1184 = vpack.c.b16 %v1173, %v1172
      %v1185 = vpack.c.b16 %v1175, %v1174
      %v1186 = vpack.c.b16 %v1177, %v1176
      %v1187 = vpack.c.b16 %v1179, %v1178
      %1196 = vmatprep.subr.bf16.mxu0 0
      %1197 = vmatpush1.bf16.msra.mxu0 %v1187
      %1198 = vmatprep.subr.bf16.mxu0 0
      %1199 = vmatpush1.bf16.msra.mxu0 %v1186
      %1200 = vmatprep.subr.bf16.mxu0 0
      %1201 = vmatpush1.bf16.msra.mxu0 %v1185
      %1202 = vmatprep.subr.bf16.mxu0 0
      %1203 = vmatpush1.bf16.msra.mxu0 %v1184
      %1204 = vmatprep.subr.bf16.mxu0 0
      %1205 = vmatpush1.bf16.msra.mxu0 %v1183
      %1206 = vmatprep.subr.bf16.mxu0 0
      %1207 = vmatpush1.bf16.msra.mxu0 %v1182
      %1208 = vmatprep.subr.bf16.mxu0 0
      %1209 = vmatpush1.bf16.msra.mxu0 %v1181
      %1210 = vmatprep.subr.bf16.mxu0 0
      %1211 = vmatpush1.bf16.msra.mxu0 %v1180
      %1212 = vmatprep.subr.bf16.mxu0 0
      %1213 = vmatpush2.bf16.msra.mxu0 0
      %1214 = vmatprep.subr.bf16.mxu0 0
      %1215 = vmatpush2.bf16.msra.mxu0 0
      %1216 = vmatprep.subr.bf16.mxu0 0
      %1217 = vmatpush2.bf16.msra.mxu0 0
      %1218 = vmatprep.subr.bf16.mxu0 0
      %1219 = vmatpush2.bf16.msra.mxu0 0
      %1220 = vmatprep.subr.bf16.mxu0 0
      %1221 = vmatpush2.bf16.msra.mxu0 0
      %1222 = vmatprep.subr.bf16.mxu0 0
      %1223 = vmatpush2.bf16.msra.mxu0 0
      %1224 = vmatprep.subr.bf16.mxu0 0
      %1225 = vmatpush2.bf16.msra.mxu0 0
      %1226 = vmatprep.subr.bf16.mxu0 0
      %1227 = vmatpush2.bf16.msra.mxu0 0
      %1228 = vmatprep.mubr.bf16.mxu0 0
      %1229 = vmatmul.mubr.bf16.gmra.mxu0 %v1144
      %v1230 = vpop.f32.mrf.mxu0
      %v1231 = vadd.f32 0.0, %v1230
      %v1232 = vpop.f32.mrf.mxu0
      %v1233 = vpop.f32.mrf.mxu0
      %v1234 = vadd.f32 0.0, %v1233
      %v1235 = vpop.f32.mrf.mxu0
      %1236 = vmatprep.mubr.bf16.mxu0 0
      %1237 = vmatmul.mubr.bf16.gmra.mxu0 %v1145
      %v1238 = vpop.f32.mrf.mxu0
      %v1239 = vadd.f32 0.0, %v1238
      %v1240 = vpop.f32.mrf.mxu0
      %v1241 = vpop.f32.mrf.mxu0
      %v1242 = vadd.f32 0.0, %v1241
      %v1243 = vpop.f32.mrf.mxu0
      %1244 = vdwg.mxu0
      %v1245 = vadd.f32 %v1121, %v1231
      %v1246 = vadd.f32 %v1122, %v1234
      %v1247 = vadd.f32 %v1123, %v1239
      %v1248 = vadd.f32 %v1124, %v1242
      %v1249 = vunpack.c.h.b16 %v644
      %v1250 = vpack.c.b16 %v1143, %v1143
      %v1251 = vpack.c.b16 %v1249, %v1249
      %v1253 = vshrl.u32 %v1250, 16
      %v1255 = vrot.slane %v1253, 4
      %v1256 = vshll.u32 %v1250, 16
      %v1258 = vrot.slane %v1256, 5
      %v1259 = vor.u32 %v1255, %v1258
      %v1260 = vrot.slane %v1259, 4
      %v1262 = vshll.u32 %v1251, 16
      %v1264 = vrot.slane %v1262, 5
      %v1265 = vsel %vm797, %v1260, %v1264
      %s1266 = scalar_lea.vmem %s4, 256
      %v1267 = vld [vmem:[%s1266] sm:$0xf]
      %v1268 = vld [vmem:[%s1266 + $0x4] sm:$0xf]
      %v1269 = vld [vmem:[%s1266 + $0x8] sm:$0xf]
      %v1270 = vld [vmem:[%s1266 + $0xc] sm:$0xf]
      %v1271 = vld [vmem:[%s1266 + $0x10] sm:$0xf]
      %v1272 = vld [vmem:[%s1266 + $0x14] sm:$0xf]
      %v1273 = vld [vmem:[%s1266 + $0x18] sm:$0xf]
      %v1274 = vld [vmem:[%s1266 + $0x1c] sm:$0xf]
      %v1275 = vld [vmem:[%s1266 + $0x20] sm:$0xf]
      %v1276 = vld [vmem:[%s1266 + $0x24] sm:$0xf]
      %v1277 = vld [vmem:[%s1266 + $0x28] sm:$0xf]
      %v1278 = vld [vmem:[%s1266 + $0x2c] sm:$0xf]
      %v1279 = vld [vmem:[%s1266 + $0x30] sm:$0xf]
      %v1280 = vld [vmem:[%s1266 + $0x34] sm:$0xf]
      %v1281 = vld [vmem:[%s1266 + $0x38] sm:$0xf]
      %v1282 = vld [vmem:[%s1266 + $0x3c] sm:$0xf]
      %v1283 = vunpack.c.l.b16 %v1265
      %v1284 = vpack.c.b16 %v873, %v872
      %v1285 = vpack.c.b16 %v1283, %v874
      %v1304 = vunpack.c.l.b16 %v1267
      %v1305 = vunpack.c.l.b16 %v1268
      %v1306 = vunpack.c.l.b16 %v1269
      %v1307 = vunpack.c.l.b16 %v1270
      %v1308 = vunpack.c.l.b16 %v1271
      %v1309 = vunpack.c.l.b16 %v1272
      %v1310 = vunpack.c.l.b16 %v1273
      %v1311 = vunpack.c.l.b16 %v1274
      %v1312 = vunpack.c.l.b16 %v1275
      %v1313 = vunpack.c.l.b16 %v1276
      %v1314 = vunpack.c.l.b16 %v1277
      %v1315 = vunpack.c.l.b16 %v1278
      %v1316 = vunpack.c.l.b16 %v1279
      %v1317 = vunpack.c.l.b16 %v1280
      %v1318 = vunpack.c.l.b16 %v1281
      %v1319 = vunpack.c.l.b16 %v1282
      %v1320 = vpack.c.b16 %v1305, %v1304
      %v1321 = vpack.c.b16 %v1307, %v1306
      %v1322 = vpack.c.b16 %v1309, %v1308
      %v1323 = vpack.c.b16 %v1311, %v1310
      %v1324 = vpack.c.b16 %v1313, %v1312
      %v1325 = vpack.c.b16 %v1315, %v1314
      %v1326 = vpack.c.b16 %v1317, %v1316
      %v1327 = vpack.c.b16 %v1319, %v1318
      %1336 = vmatprep.subr.bf16.mxu0 0
      %1337 = vmatpush1.bf16.msra.mxu0 %v1327
      %1338 = vmatprep.subr.bf16.mxu0 0
      %1339 = vmatpush1.bf16.msra.mxu0 %v1326
      %1340 = vmatprep.subr.bf16.mxu0 0
      %1341 = vmatpush1.bf16.msra.mxu0 %v1325
      %1342 = vmatprep.subr.bf16.mxu0 0
      %1343 = vmatpush1.bf16.msra.mxu0 %v1324
      %1344 = vmatprep.subr.bf16.mxu0 0
      %1345 = vmatpush1.bf16.msra.mxu0 %v1323
      %1346 = vmatprep.subr.bf16.mxu0 0
      %1347 = vmatpush1.bf16.msra.mxu0 %v1322
      %1348 = vmatprep.subr.bf16.mxu0 0
      %1349 = vmatpush1.bf16.msra.mxu0 %v1321
      %1350 = vmatprep.subr.bf16.mxu0 0
      %1351 = vmatpush1.bf16.msra.mxu0 %v1320
      %1352 = vmatprep.subr.bf16.mxu0 0
      %1353 = vmatpush2.bf16.msra.mxu0 0
      %1354 = vmatprep.subr.bf16.mxu0 0
      %1355 = vmatpush2.bf16.msra.mxu0 0
      %1356 = vmatprep.subr.bf16.mxu0 0
      %1357 = vmatpush2.bf16.msra.mxu0 0
      %1358 = vmatprep.subr.bf16.mxu0 0
      %1359 = vmatpush2.bf16.msra.mxu0 0
      %1360 = vmatprep.subr.bf16.mxu0 0
      %1361 = vmatpush2.bf16.msra.mxu0 0
      %1362 = vmatprep.subr.bf16.mxu0 0
      %1363 = vmatpush2.bf16.msra.mxu0 0
      %1364 = vmatprep.subr.bf16.mxu0 0
      %1365 = vmatpush2.bf16.msra.mxu0 0
      %1366 = vmatprep.subr.bf16.mxu0 0
      %1367 = vmatpush2.bf16.msra.mxu0 0
      %1368 = vmatprep.mubr.bf16.mxu0 0
      %1369 = vmatmul.mubr.bf16.gmra.mxu0 %v1284
      %v1370 = vpop.f32.mrf.mxu0
      %v1371 = vadd.f32 0.0, %v1370
      %v1372 = vpop.f32.mrf.mxu0
      %v1373 = vpop.f32.mrf.mxu0
      %v1374 = vadd.f32 0.0, %v1373
      %v1375 = vpop.f32.mrf.mxu0
      %1376 = vmatprep.mubr.bf16.mxu0 0
      %1377 = vmatmul.mubr.bf16.gmra.mxu0 %v1285
      %v1378 = vpop.f32.mrf.mxu0
      %v1379 = vadd.f32 0.0, %v1378
      %v1380 = vpop.f32.mrf.mxu0
      %v1381 = vpop.f32.mrf.mxu0
      %v1382 = vadd.f32 0.0, %v1381
      %v1383 = vpop.f32.mrf.mxu0
      %1384 = vdwg.mxu0
      %v1385 = vadd.f32 %v1245, %v1371
      %v1386 = vadd.f32 %v1246, %v1374
      %v1387 = vadd.f32 %v1247, %v1379
      %v1388 = vadd.f32 %v1248, %v1382
      %v1389 = vrot.slane %v1250, 5
      %v1390 = vrot.slane %v1389, 4
      %v1391 = vrot.slane %v1251, 5
      %v1392 = vsel %vm982, %v1390, %v1391
      %s1393 = scalar_lea.vmem %s4, 320
      %v1394 = vld [vmem:[%s1393] sm:$0xf]
      %v1395 = vld [vmem:[%s1393 + $0x4] sm:$0xf]
      %v1396 = vld [vmem:[%s1393 + $0x8] sm:$0xf]
      %v1397 = vld [vmem:[%s1393 + $0xc] sm:$0xf]
      %v1398 = vld [vmem:[%s1393 + $0x10] sm:$0xf]
      %v1399 = vld [vmem:[%s1393 + $0x14] sm:$0xf]
      %v1400 = vld [vmem:[%s1393 + $0x18] sm:$0xf]
      %v1401 = vld [vmem:[%s1393 + $0x1c] sm:$0xf]
      %v1402 = vld [vmem:[%s1393 + $0x20] sm:$0xf]
      %v1403 = vld [vmem:[%s1393 + $0x24] sm:$0xf]
      %v1404 = vld [vmem:[%s1393 + $0x28] sm:$0xf]
      %v1405 = vld [vmem:[%s1393 + $0x2c] sm:$0xf]
      %v1406 = vld [vmem:[%s1393 + $0x30] sm:$0xf]
      %v1407 = vld [vmem:[%s1393 + $0x34] sm:$0xf]
      %v1408 = vld [vmem:[%s1393 + $0x38] sm:$0xf]
      %v1409 = vld [vmem:[%s1393 + $0x3c] sm:$0xf]
      %v1410 = vunpack.c.l.b16 %v1392
      %v1411 = vpack.c.b16 %v1018, %v1017
      %v1412 = vpack.c.b16 %v1410, %v1019
      %v1431 = vunpack.c.l.b16 %v1394
      %v1432 = vunpack.c.l.b16 %v1395
      %v1433 = vunpack.c.l.b16 %v1396
      %v1434 = vunpack.c.l.b16 %v1397
      %v1435 = vunpack.c.l.b16 %v1398
      %v1436 = vunpack.c.l.b16 %v1399
      %v1437 = vunpack.c.l.b16 %v1400
      %v1438 = vunpack.c.l.b16 %v1401
      %v1439 = vunpack.c.l.b16 %v1402
      %v1440 = vunpack.c.l.b16 %v1403
      %v1441 = vunpack.c.l.b16 %v1404
      %v1442 = vunpack.c.l.b16 %v1405
      %v1443 = vunpack.c.l.b16 %v1406
      %v1444 = vunpack.c.l.b16 %v1407
      %v1445 = vunpack.c.l.b16 %v1408
      %v1446 = vunpack.c.l.b16 %v1409
      %v1447 = vpack.c.b16 %v1432, %v1431
      %v1448 = vpack.c.b16 %v1434, %v1433
      %v1449 = vpack.c.b16 %v1436, %v1435
      %v1450 = vpack.c.b16 %v1438, %v1437
      %v1451 = vpack.c.b16 %v1440, %v1439
      %v1452 = vpack.c.b16 %v1442, %v1441
      %v1453 = vpack.c.b16 %v1444, %v1443
      %v1454 = vpack.c.b16 %v1446, %v1445
      %1463 = vmatprep.subr.bf16.mxu0 0
      %1464 = vmatpush1.bf16.msra.mxu0 %v1454
      %1465 = vmatprep.subr.bf16.mxu0 0
      %1466 = vmatpush1.bf16.msra.mxu0 %v1453
      %1467 = vmatprep.subr.bf16.mxu0 0
      %1468 = vmatpush1.bf16.msra.mxu0 %v1452
      %1469 = vmatprep.subr.bf16.mxu0 0
      %1470 = vmatpush1.bf16.msra.mxu0 %v1451
      %1471 = vmatprep.subr.bf16.mxu0 0
      %1472 = vmatpush1.bf16.msra.mxu0 %v1450
      %1473 = vmatprep.subr.bf16.mxu0 0
      %1474 = vmatpush1.bf16.msra.mxu0 %v1449
      %1475 = vmatprep.subr.bf16.mxu0 0
      %1476 = vmatpush1.bf16.msra.mxu0 %v1448
      %1477 = vmatprep.subr.bf16.mxu0 0
      %1478 = vmatpush1.bf16.msra.mxu0 %v1447
      %1479 = vmatprep.subr.bf16.mxu0 0
      %1480 = vmatpush2.bf16.msra.mxu0 0
      %1481 = vmatprep.subr.bf16.mxu0 0
      %1482 = vmatpush2.bf16.msra.mxu0 0
      %1483 = vmatprep.subr.bf16.mxu0 0
      %1484 = vmatpush2.bf16.msra.mxu0 0
      %1485 = vmatprep.subr.bf16.mxu0 0
      %1486 = vmatpush2.bf16.msra.mxu0 0
      %1487 = vmatprep.subr.bf16.mxu0 0
      %1488 = vmatpush2.bf16.msra.mxu0 0
      %1489 = vmatprep.subr.bf16.mxu0 0
      %1490 = vmatpush2.bf16.msra.mxu0 0
      %1491 = vmatprep.subr.bf16.mxu0 0
      %1492 = vmatpush2.bf16.msra.mxu0 0
      %1493 = vmatprep.subr.bf16.mxu0 0
      %1494 = vmatpush2.bf16.msra.mxu0 0
      %1495 = vmatprep.mubr.bf16.mxu0 0
      %1496 = vmatmul.mubr.bf16.gmra.mxu0 %v1411
      %v1497 = vpop.f32.mrf.mxu0
      %v1498 = vadd.f32 0.0, %v1497
      %v1499 = vpop.f32.mrf.mxu0
      %v1500 = vpop.f32.mrf.mxu0
      %v1501 = vadd.f32 0.0, %v1500
      %v1502 = vpop.f32.mrf.mxu0
      %1503 = vmatprep.mubr.bf16.mxu0 0
      %1504 = vmatmul.mubr.bf16.gmra.mxu0 %v1412
      %v1505 = vpop.f32.mrf.mxu0
      %v1506 = vadd.f32 0.0, %v1505
      %v1507 = vpop.f32.mrf.mxu0
      %v1508 = vpop.f32.mrf.mxu0
      %v1509 = vadd.f32 0.0, %v1508
      %v1510 = vpop.f32.mrf.mxu0
      %1511 = vdwg.mxu0
      %v1512 = vadd.f32 %v1385, %v1498
      %v1513 = vadd.f32 %v1386, %v1501
      %v1514 = vadd.f32 %v1387, %v1506
      %v1515 = vadd.f32 %v1388, %v1509
      %s1516 = scalar_lea.vmem %s4, 384
      %v1517 = vld [vmem:[%s1516] sm:$0xf]
      %v1518 = vld [vmem:[%s1516 + $0x4] sm:$0xf]
      %v1519 = vld [vmem:[%s1516 + $0x8] sm:$0xf]
      %v1520 = vld [vmem:[%s1516 + $0xc] sm:$0xf]
      %v1521 = vld [vmem:[%s1516 + $0x10] sm:$0xf]
      %v1522 = vld [vmem:[%s1516 + $0x14] sm:$0xf]
      %v1523 = vld [vmem:[%s1516 + $0x18] sm:$0xf]
      %v1524 = vld [vmem:[%s1516 + $0x1c] sm:$0xf]
      %v1525 = vld [vmem:[%s1516 + $0x20] sm:$0xf]
      %v1526 = vld [vmem:[%s1516 + $0x24] sm:$0xf]
      %v1527 = vld [vmem:[%s1516 + $0x28] sm:$0xf]
      %v1528 = vld [vmem:[%s1516 + $0x2c] sm:$0xf]
      %v1529 = vld [vmem:[%s1516 + $0x30] sm:$0xf]
      %v1530 = vld [vmem:[%s1516 + $0x34] sm:$0xf]
      %v1531 = vld [vmem:[%s1516 + $0x38] sm:$0xf]
      %v1532 = vld [vmem:[%s1516 + $0x3c] sm:$0xf]
      %v1534 = vunpack.c.l.b16 %v645
      %v1535 = vpack.c.b16 %v1534, %v1143
      %v1553 = vunpack.c.l.b16 %v1517
      %v1554 = vunpack.c.l.b16 %v1518
      %v1555 = vunpack.c.l.b16 %v1519
      %v1556 = vunpack.c.l.b16 %v1520
      %v1557 = vunpack.c.l.b16 %v1521
      %v1558 = vunpack.c.l.b16 %v1522
      %v1559 = vunpack.c.l.b16 %v1523
      %v1560 = vunpack.c.l.b16 %v1524
      %v1561 = vunpack.c.l.b16 %v1525
      %v1562 = vunpack.c.l.b16 %v1526
      %v1563 = vunpack.c.l.b16 %v1527
      %v1564 = vunpack.c.l.b16 %v1528
      %v1565 = vunpack.c.l.b16 %v1529
      %v1566 = vunpack.c.l.b16 %v1530
      %v1567 = vunpack.c.l.b16 %v1531
      %v1568 = vunpack.c.l.b16 %v1532
      %v1569 = vpack.c.b16 %v1554, %v1553
      %v1570 = vpack.c.b16 %v1556, %v1555
      %v1571 = vpack.c.b16 %v1558, %v1557
      %v1572 = vpack.c.b16 %v1560, %v1559
      %v1573 = vpack.c.b16 %v1562, %v1561
      %v1574 = vpack.c.b16 %v1564, %v1563
      %v1575 = vpack.c.b16 %v1566, %v1565
      %v1576 = vpack.c.b16 %v1568, %v1567
      %1585 = vmatprep.subr.bf16.mxu0 0
      %1586 = vmatpush1.bf16.msra.mxu0 %v1576
      %1587 = vmatprep.subr.bf16.mxu0 0
      %1588 = vmatpush1.bf16.msra.mxu0 %v1575
      %1589 = vmatprep.subr.bf16.mxu0 0
      %1590 = vmatpush1.bf16.msra.mxu0 %v1574
      %1591 = vmatprep.subr.bf16.mxu0 0
      %1592 = vmatpush1.bf16.msra.mxu0 %v1573
      %1593 = vmatprep.subr.bf16.mxu0 0
      %1594 = vmatpush1.bf16.msra.mxu0 %v1572
      %1595 = vmatprep.subr.bf16.mxu0 0
      %1596 = vmatpush1.bf16.msra.mxu0 %v1571
      %1597 = vmatprep.subr.bf16.mxu0 0
      %1598 = vmatpush1.bf16.msra.mxu0 %v1570
      %1599 = vmatprep.subr.bf16.mxu0 0
      %1600 = vmatpush1.bf16.msra.mxu0 %v1569
      %1601 = vmatprep.subr.bf16.mxu0 0
      %1602 = vmatpush2.bf16.msra.mxu0 0
      %1603 = vmatprep.subr.bf16.mxu0 0
      %1604 = vmatpush2.bf16.msra.mxu0 0
      %1605 = vmatprep.subr.bf16.mxu0 0
      %1606 = vmatpush2.bf16.msra.mxu0 0
      %1607 = vmatprep.subr.bf16.mxu0 0
      %1608 = vmatpush2.bf16.msra.mxu0 0
      %1609 = vmatprep.subr.bf16.mxu0 0
      %1610 = vmatpush2.bf16.msra.mxu0 0
      %1611 = vmatprep.subr.bf16.mxu0 0
      %1612 = vmatpush2.bf16.msra.mxu0 0
      %1613 = vmatprep.subr.bf16.mxu0 0
      %1614 = vmatpush2.bf16.msra.mxu0 0
      %1615 = vmatprep.subr.bf16.mxu0 0
      %1616 = vmatpush2.bf16.msra.mxu0 0
      %1617 = vmatprep.mubr.bf16.mxu0 0
      %1618 = vmatmul.mubr.bf16.gmra.mxu0 %v679
      %v1619 = vpop.f32.mrf.mxu0
      %v1620 = vadd.f32 0.0, %v1619
      %v1621 = vpop.f32.mrf.mxu0
      %v1622 = vpop.f32.mrf.mxu0
      %v1623 = vadd.f32 0.0, %v1622
      %v1624 = vpop.f32.mrf.mxu0
      %1625 = vmatprep.mubr.bf16.mxu0 0
      %1626 = vmatmul.mubr.bf16.gmra.mxu0 %v1535
      %v1627 = vpop.f32.mrf.mxu0
      %v1628 = vadd.f32 0.0, %v1627
      %v1629 = vpop.f32.mrf.mxu0
      %v1630 = vpop.f32.mrf.mxu0
      %v1631 = vadd.f32 0.0, %v1630
      %v1632 = vpop.f32.mrf.mxu0
      %1633 = vdwg.mxu0
      %v1634 = vadd.f32 %v1512, %v1620
      %v1635 = vadd.f32 %v1513, %v1623
      %v1636 = vadd.f32 %v1514, %v1628
      %v1637 = vadd.f32 %v1515, %v1631
      %v1638 = vunpack.c.h.b16 %v645
      %v1639 = vpack.c.b16 %v1534, %v1534
      %v1640 = vpack.c.b16 %v1638, %v1638
      %v1642 = vshrl.u32 %v1639, 16
      %v1644 = vrot.slane %v1642, 4
      %v1645 = vshll.u32 %v1639, 16
      %v1647 = vrot.slane %v1645, 5
      %v1648 = vor.u32 %v1644, %v1647
      %v1649 = vrot.slane %v1648, 4
      %v1651 = vshll.u32 %v1640, 16
      %v1653 = vrot.slane %v1651, 5
      %v1654 = vsel %vm797, %v1649, %v1653
      %s1655 = scalar_lea.vmem %s4, 448
      %v1656 = vld [vmem:[%s1655] sm:$0xf]
      %v1657 = vld [vmem:[%s1655 + $0x4] sm:$0xf]
      %v1658 = vld [vmem:[%s1655 + $0x8] sm:$0xf]
      %v1659 = vld [vmem:[%s1655 + $0xc] sm:$0xf]
      %v1660 = vld [vmem:[%s1655 + $0x10] sm:$0xf]
      %v1661 = vld [vmem:[%s1655 + $0x14] sm:$0xf]
      %v1662 = vld [vmem:[%s1655 + $0x18] sm:$0xf]
      %v1663 = vld [vmem:[%s1655 + $0x1c] sm:$0xf]
      %v1664 = vld [vmem:[%s1655 + $0x20] sm:$0xf]
      %v1665 = vld [vmem:[%s1655 + $0x24] sm:$0xf]
      %v1666 = vld [vmem:[%s1655 + $0x28] sm:$0xf]
      %v1667 = vld [vmem:[%s1655 + $0x2c] sm:$0xf]
      %v1668 = vld [vmem:[%s1655 + $0x30] sm:$0xf]
      %v1669 = vld [vmem:[%s1655 + $0x34] sm:$0xf]
      %v1670 = vld [vmem:[%s1655 + $0x38] sm:$0xf]
      %v1671 = vld [vmem:[%s1655 + $0x3c] sm:$0xf]
      %v1672 = vunpack.c.l.b16 %v1654
      %v1673 = vpack.c.b16 %v1672, %v1283
      %v1691 = vunpack.c.l.b16 %v1656
      %v1692 = vunpack.c.l.b16 %v1657
      %v1693 = vunpack.c.l.b16 %v1658
      %v1694 = vunpack.c.l.b16 %v1659
      %v1695 = vunpack.c.l.b16 %v1660
      %v1696 = vunpack.c.l.b16 %v1661
      %v1697 = vunpack.c.l.b16 %v1662
      %v1698 = vunpack.c.l.b16 %v1663
      %v1699 = vunpack.c.l.b16 %v1664
      %v1700 = vunpack.c.l.b16 %v1665
      %v1701 = vunpack.c.l.b16 %v1666
      %v1702 = vunpack.c.l.b16 %v1667
      %v1703 = vunpack.c.l.b16 %v1668
      %v1704 = vunpack.c.l.b16 %v1669
      %v1705 = vunpack.c.l.b16 %v1670
      %v1706 = vunpack.c.l.b16 %v1671
      %v1707 = vpack.c.b16 %v1692, %v1691
      %v1708 = vpack.c.b16 %v1694, %v1693
      %v1709 = vpack.c.b16 %v1696, %v1695
      %v1710 = vpack.c.b16 %v1698, %v1697
      %v1711 = vpack.c.b16 %v1700, %v1699
      %v1712 = vpack.c.b16 %v1702, %v1701
      %v1713 = vpack.c.b16 %v1704, %v1703
      %v1714 = vpack.c.b16 %v1706, %v1705
      %1723 = vmatprep.subr.bf16.mxu0 0
      %1724 = vmatpush1.bf16.msra.mxu0 %v1714
      %1725 = vmatprep.subr.bf16.mxu0 0
      %1726 = vmatpush1.bf16.msra.mxu0 %v1713
      %1727 = vmatprep.subr.bf16.mxu0 0
      %1728 = vmatpush1.bf16.msra.mxu0 %v1712
      %1729 = vmatprep.subr.bf16.mxu0 0
      %1730 = vmatpush1.bf16.msra.mxu0 %v1711
      %1731 = vmatprep.subr.bf16.mxu0 0
      %1732 = vmatpush1.bf16.msra.mxu0 %v1710
      %1733 = vmatprep.subr.bf16.mxu0 0
      %1734 = vmatpush1.bf16.msra.mxu0 %v1709
      %1735 = vmatprep.subr.bf16.mxu0 0
      %1736 = vmatpush1.bf16.msra.mxu0 %v1708
      %1737 = vmatprep.subr.bf16.mxu0 0
      %1738 = vmatpush1.bf16.msra.mxu0 %v1707
      %1739 = vmatprep.subr.bf16.mxu0 0
      %1740 = vmatpush2.bf16.msra.mxu0 0
      %1741 = vmatprep.subr.bf16.mxu0 0
      %1742 = vmatpush2.bf16.msra.mxu0 0
      %1743 = vmatprep.subr.bf16.mxu0 0
      %1744 = vmatpush2.bf16.msra.mxu0 0
      %1745 = vmatprep.subr.bf16.mxu0 0
      %1746 = vmatpush2.bf16.msra.mxu0 0
      %1747 = vmatprep.subr.bf16.mxu0 0
      %1748 = vmatpush2.bf16.msra.mxu0 0
      %1749 = vmatprep.subr.bf16.mxu0 0
      %1750 = vmatpush2.bf16.msra.mxu0 0
      %1751 = vmatprep.subr.bf16.mxu0 0
      %1752 = vmatpush2.bf16.msra.mxu0 0
      %1753 = vmatprep.subr.bf16.mxu0 0
      %1754 = vmatpush2.bf16.msra.mxu0 0
      %1755 = vmatprep.mubr.bf16.mxu0 0
      %1756 = vmatmul.mubr.bf16.gmra.mxu0 %v876
      %v1757 = vpop.f32.mrf.mxu0
      %v1758 = vadd.f32 0.0, %v1757
      %v1759 = vpop.f32.mrf.mxu0
      %v1760 = vpop.f32.mrf.mxu0
      %v1761 = vadd.f32 0.0, %v1760
      %v1762 = vpop.f32.mrf.mxu0
      %1763 = vmatprep.mubr.bf16.mxu0 0
      %1764 = vmatmul.mubr.bf16.gmra.mxu0 %v1673
      %v1765 = vpop.f32.mrf.mxu0
      %v1766 = vadd.f32 0.0, %v1765
      %v1767 = vpop.f32.mrf.mxu0
      %v1768 = vpop.f32.mrf.mxu0
      %v1769 = vadd.f32 0.0, %v1768
      %v1770 = vpop.f32.mrf.mxu0
      %1771 = vdwg.mxu0
      %v1772 = vadd.f32 %v1634, %v1758
      %v1773 = vadd.f32 %v1635, %v1761
      %v1774 = vadd.f32 %v1636, %v1766
      %v1775 = vadd.f32 %v1637, %v1769
      %v1776 = vrot.slane %v1639, 5
      %v1777 = vrot.slane %v1776, 4
      %v1778 = vrot.slane %v1640, 5
      %v1779 = vsel %vm982, %v1777, %v1778
      %s1780 = scalar_lea.vmem %s4, 512
      %v1781 = vld [vmem:[%s1780] sm:$0xf]
      %v1782 = vld [vmem:[%s1780 + $0x4] sm:$0xf]
      %v1783 = vld [vmem:[%s1780 + $0x8] sm:$0xf]
      %v1784 = vld [vmem:[%s1780 + $0xc] sm:$0xf]
      %v1785 = vld [vmem:[%s1780 + $0x10] sm:$0xf]
      %v1786 = vld [vmem:[%s1780 + $0x14] sm:$0xf]
      %v1787 = vld [vmem:[%s1780 + $0x18] sm:$0xf]
      %v1788 = vld [vmem:[%s1780 + $0x1c] sm:$0xf]
      %v1789 = vld [vmem:[%s1780 + $0x20] sm:$0xf]
      %v1790 = vld [vmem:[%s1780 + $0x24] sm:$0xf]
      %v1791 = vld [vmem:[%s1780 + $0x28] sm:$0xf]
      %v1792 = vld [vmem:[%s1780 + $0x2c] sm:$0xf]
      %v1793 = vld [vmem:[%s1780 + $0x30] sm:$0xf]
      %v1794 = vld [vmem:[%s1780 + $0x34] sm:$0xf]
      %v1795 = vld [vmem:[%s1780 + $0x38] sm:$0xf]
      %v1796 = vld [vmem:[%s1780 + $0x3c] sm:$0xf]
      %v1797 = vunpack.c.l.b16 %v1779
      %v1798 = vpack.c.b16 %v1797, %v1410
      %v1816 = vunpack.c.l.b16 %v1781
      %v1817 = vunpack.c.l.b16 %v1782
      %v1818 = vunpack.c.l.b16 %v1783
      %v1819 = vunpack.c.l.b16 %v1784
      %v1820 = vunpack.c.l.b16 %v1785
      %v1821 = vunpack.c.l.b16 %v1786
      %v1822 = vunpack.c.l.b16 %v1787
      %v1823 = vunpack.c.l.b16 %v1788
      %v1824 = vunpack.c.l.b16 %v1789
      %v1825 = vunpack.c.l.b16 %v1790
      %v1826 = vunpack.c.l.b16 %v1791
      %v1827 = vunpack.c.l.b16 %v1792
      %v1828 = vunpack.c.l.b16 %v1793
      %v1829 = vunpack.c.l.b16 %v1794
      %v1830 = vunpack.c.l.b16 %v1795
      %v1831 = vunpack.c.l.b16 %v1796
      %v1832 = vpack.c.b16 %v1817, %v1816
      %v1833 = vpack.c.b16 %v1819, %v1818
      %v1834 = vpack.c.b16 %v1821, %v1820
      %v1835 = vpack.c.b16 %v1823, %v1822
      %v1836 = vpack.c.b16 %v1825, %v1824
      %v1837 = vpack.c.b16 %v1827, %v1826
      %v1838 = vpack.c.b16 %v1829, %v1828
      %v1839 = vpack.c.b16 %v1831, %v1830
      %1848 = vmatprep.subr.bf16.mxu0 0
      %1849 = vmatpush1.bf16.msra.mxu0 %v1839
      %1850 = vmatprep.subr.bf16.mxu0 0
      %1851 = vmatpush1.bf16.msra.mxu0 %v1838
      %1852 = vmatprep.subr.bf16.mxu0 0
      %1853 = vmatpush1.bf16.msra.mxu0 %v1837
      %1854 = vmatprep.subr.bf16.mxu0 0
      %1855 = vmatpush1.bf16.msra.mxu0 %v1836
      %1856 = vmatprep.subr.bf16.mxu0 0
      %1857 = vmatpush1.bf16.msra.mxu0 %v1835
      %1858 = vmatprep.subr.bf16.mxu0 0
      %1859 = vmatpush1.bf16.msra.mxu0 %v1834
      %1860 = vmatprep.subr.bf16.mxu0 0
      %1861 = vmatpush1.bf16.msra.mxu0 %v1833
      %1862 = vmatprep.subr.bf16.mxu0 0
      %1863 = vmatpush1.bf16.msra.mxu0 %v1832
      %1864 = vmatprep.subr.bf16.mxu0 0
      %1865 = vmatpush2.bf16.msra.mxu0 0
      %1866 = vmatprep.subr.bf16.mxu0 0
      %1867 = vmatpush2.bf16.msra.mxu0 0
      %1868 = vmatprep.subr.bf16.mxu0 0
      %1869 = vmatpush2.bf16.msra.mxu0 0
      %1870 = vmatprep.subr.bf16.mxu0 0
      %1871 = vmatpush2.bf16.msra.mxu0 0
      %1872 = vmatprep.subr.bf16.mxu0 0
      %1873 = vmatpush2.bf16.msra.mxu0 0
      %1874 = vmatprep.subr.bf16.mxu0 0
      %1875 = vmatpush2.bf16.msra.mxu0 0
      %1876 = vmatprep.subr.bf16.mxu0 0
      %1877 = vmatpush2.bf16.msra.mxu0 0
      %1878 = vmatprep.subr.bf16.mxu0 0
      %1879 = vmatpush2.bf16.msra.mxu0 0
      %1880 = vmatprep.mubr.bf16.mxu0 0
      %1881 = vmatmul.mubr.bf16.gmra.mxu0 %v1021
      %v1882 = vpop.f32.mrf.mxu0
      %v1883 = vadd.f32 0.0, %v1882
      %v1884 = vpop.f32.mrf.mxu0
      %v1885 = vpop.f32.mrf.mxu0
      %v1886 = vadd.f32 0.0, %v1885
      %v1887 = vpop.f32.mrf.mxu0
      %1888 = vmatprep.mubr.bf16.mxu0 0
      %1889 = vmatmul.mubr.bf16.gmra.mxu0 %v1798
      %v1890 = vpop.f32.mrf.mxu0
      %v1891 = vadd.f32 0.0, %v1890
      %v1892 = vpop.f32.mrf.mxu0
      %v1893 = vpop.f32.mrf.mxu0
      %v1894 = vadd.f32 0.0, %v1893
      %v1895 = vpop.f32.mrf.mxu0
      %1896 = vdwg.mxu0
      %v1897 = vadd.f32 %v1772, %v1883
      %v1898 = vadd.f32 %v1773, %v1886
      %v1899 = vadd.f32 %v1774, %v1891
      %v1900 = vadd.f32 %v1775, %v1894
      %v1901 = vmul.f32 %v1897, %v1897
      %v1902 = vmul.f32 %v1898, %v1898
      %v1903 = vmul.f32 %v1899, %v1899
      %v1904 = vmul.f32 %v1900, %v1900
      %v1905 = vld [vmem:[%s6] sm:$0xff]
      %v1906 = vld [vmem:[%s6 + $0x8] sm:$0xff]
      %v1907 = vld [vmem:[%s6 + $0x10] sm:$0xff]
      %v1908 = vld [vmem:[%s6 + $0x18] sm:$0xff]
      %v1909 = vld [vmem:[%s6 + $0x20] sm:$0xff]
      %v1910 = vld [vmem:[%s6 + $0x28] sm:$0xff]
      %v1911 = vld [vmem:[%s6 + $0x30] sm:$0xff]
      %v1912 = vld [vmem:[%s6 + $0x38] sm:$0xff]
      %v1913 = vld [vmem:[%s6 + $0x40] sm:$0xff]
      %v1914 = vld [vmem:[%s6 + $0x48] sm:$0xff]
      %v1915 = vld [vmem:[%s6 + $0x50] sm:$0xff]
      %v1916 = vld [vmem:[%s6 + $0x58] sm:$0xff]
      %v1917 = vld [vmem:[%s6 + $0x60] sm:$0xff]
      %v1918 = vld [vmem:[%s6 + $0x68] sm:$0xff]
      %v1919 = vld [vmem:[%s6 + $0x70] sm:$0xff]
      %v1920 = vld [vmem:[%s6 + $0x78] sm:$0xff]
      %v1921 = vld [vmem:[%s7] sm:$0x1]
      %v1923 = vlaneseq
      %v1924 = vshrl.u32 %v1923, 7
      %v1925 = vsub.s32 0, %v1924
      %v1926 = vrot.slane %v1921, %v1925
      %1928 = vmatprep.subr.mxu0 0.0
      %1929 = vmatpush1.msra.mxu0 %v1920
      %1930 = vmatprep.subr.mxu0 0.0
      %1931 = vmatpush1.msra.mxu0 %v1919
      %1932 = vmatprep.subr.mxu0 0.0
      %1933 = vmatpush1.msra.mxu0 %v1918
      %1934 = vmatprep.subr.mxu0 0.0
      %1935 = vmatpush1.msra.mxu0 %v1917
      %1936 = vmatprep.subr.mxu0 0.0
      %1937 = vmatpush1.msra.mxu0 %v1916
      %1938 = vmatprep.subr.mxu0 0.0
      %1939 = vmatpush1.msra.mxu0 %v1915
      %1940 = vmatprep.subr.mxu0 0.0
      %1941 = vmatpush1.msra.mxu0 %v1914
      %1942 = vmatprep.subr.mxu0 0.0
      %1943 = vmatpush1.msra.mxu0 %v1913
      %1944 = vmatprep.subr.mxu0 0.0
      %1945 = vmatpush1.msra.mxu0 %v1912
      %1946 = vmatprep.subr.mxu0 0.0
      %1947 = vmatpush1.msra.mxu0 %v1911
      %1948 = vmatprep.subr.mxu0 0.0
      %1949 = vmatpush1.msra.mxu0 %v1910
      %1950 = vmatprep.subr.mxu0 0.0
      %1951 = vmatpush1.msra.mxu0 %v1909
      %1952 = vmatprep.subr.mxu0 0.0
      %1953 = vmatpush1.msra.mxu0 %v1908
      %1954 = vmatprep.subr.mxu0 0.0
      %1955 = vmatpush1.msra.mxu0 %v1907
      %1956 = vmatprep.subr.mxu0 0.0
      %1957 = vmatpush1.msra.mxu0 %v1906
      %1958 = vmatprep.subr.mxu0 0.0
      %1959 = vmatpush1.msra.mxu0 %v1905
      %1960 = vmatprep.subr.mxu0 0.0
      %1961 = vmatpush2.msra.mxu0 0.0
      %1962 = vmatprep.subr.mxu0 0.0
      %1963 = vmatpush2.msra.mxu0 0.0
      %1964 = vmatprep.subr.mxu0 0.0
      %1965 = vmatpush2.msra.mxu0 0.0
      %1966 = vmatprep.subr.mxu0 0.0
      %1967 = vmatpush2.msra.mxu0 0.0
      %1968 = vmatprep.subr.mxu0 0.0
      %1969 = vmatpush2.msra.mxu0 0.0
      %1970 = vmatprep.subr.mxu0 0.0
      %1971 = vmatpush2.msra.mxu0 0.0
      %1972 = vmatprep.subr.mxu0 0.0
      %1973 = vmatpush2.msra.mxu0 0.0
      %1974 = vmatprep.subr.mxu0 0.0
      %1975 = vmatpush2.msra.mxu0 0.0
      %1976 = vmatprep.subr.mxu0 0.0
      %1977 = vmatpush2.msra.mxu0 0.0
      %1978 = vmatprep.subr.mxu0 0.0
      %1979 = vmatpush2.msra.mxu0 0.0
      %1980 = vmatprep.subr.mxu0 0.0
      %1981 = vmatpush2.msra.mxu0 0.0
      %1982 = vmatprep.subr.mxu0 0.0
      %1983 = vmatpush2.msra.mxu0 0.0
      %1984 = vmatprep.subr.mxu0 0.0
      %1985 = vmatpush2.msra.mxu0 0.0
      %1986 = vmatprep.subr.mxu0 0.0
      %1987 = vmatpush2.msra.mxu0 0.0
      %1988 = vmatprep.subr.mxu0 0.0
      %1989 = vmatpush2.msra.mxu0 0.0
      %1990 = vmatprep.subr.mxu0 0.0
      %1991 = vmatpush2.msra.mxu0 0.0
      %1992 = vmatprep.mubr.f32.mxu0 0.0
      %1993 = vmatmul.mubr.f32.gmra.mxu0 %v1901
      %v1994 = vpop.f32.mrf.mxu0
      %v1995 = vadd.f32 %v1926, %v1994
      %v1996 = vpop.f32.mrf.mxu0
      %1997 = vmatprep.mubr.f32.mxu0 0.0
      %1998 = vmatmul.mubr.f32.gmra.mxu0 %v1902
      %v1999 = vpop.f32.mrf.mxu0
      %v2000 = vadd.f32 %v1926, %v1999
      %v2001 = vpop.f32.mrf.mxu0
      %2002 = vmatprep.mubr.f32.mxu0 0.0
      %2003 = vmatmul.mubr.f32.gmra.mxu0 %v1903
      %v2004 = vpop.f32.mrf.mxu0
      %v2005 = vadd.f32 %v1926, %v2004
      %v2006 = vpop.f32.mrf.mxu0
      %2007 = vmatprep.mubr.f32.mxu0 0.0
      %2008 = vmatmul.mubr.f32.gmra.mxu0 %v1904
      %v2009 = vpop.f32.mrf.mxu0
      %v2010 = vadd.f32 %v1926, %v2009
      %v2011 = vpop.f32.mrf.mxu0
      %2012 = vdwg.mxu0
      %v2013 = vrsqrt.pop %v1995
      %v2014 = vrsqrt.pop %v2000
      %v2015 = vrsqrt.pop %v2005
      %v2016 = vrsqrt.pop %v2010
      %v2017 = vmul.f32 %v1897, %v2013
      %v2018 = vmul.f32 %v1898, %v2014
      %v2019 = vmul.f32 %v1899, %v2015
      %v2020 = vmul.f32 %v1900, %v2016
      %v2021 = vadd.f32 %v2017, %v576
      %v2022 = vadd.f32 %v2018, %v577
      %v2023 = vadd.f32 %v2019, %v578
      %v2024 = vadd.f32 %v2020, %v579
      %2025 = vst [vmem:[%s305] sm:$0xff] %v2021
      %2026 = vst [vmem:[%s305 + $0x8] sm:$0xff] %v2022
      %2027 = vst [vmem:[%s305 + $0x10] sm:$0xff] %v2023
      %2028 = vst [vmem:[%s305 + $0x18] sm:$0xff] %v2024
      %p2029 = scmp.lt.s32.totalorder %s19, 3
      %s2030 = scalar_select %p2029, %s19, 3
      %s2031 = smul.addr %s2030, 4
      %s2032 = smul.addr %s2031, 8
      %s2033 = scalar_lea.vmem %s8, %s2032
      // Predicated region
      $region53: #{residual_block_with_stride.1} parent=51 // pred_check
        %p2034 = pneg %p210
      $region54: #{residual_block_with_stride.1} parent=51 // pred_check_branch
        %2036 = sbr.rel (%p2034) target = $region56
      $region55: #{residual_block_with_stride.1} parent=51 // pred_region
        _
      $region56: #{residual_block_with_stride.1} parent=51 // pred_fallthru
        _
    $region52: #{residual_block_with_stride.1} parent=5 // pred_fallthru
      _
    %p2037 = scmp.le.s32.totalorder 2, %s14
    // Predicated region
    $region57: #{residual_block_with_stride.1} parent=5 // pred_check
      %p2038 = pneg %p2037
    $region58: #{residual_block_with_stride.1} parent=5 // pred_check_branch
      %2040 = sbr.rel (%p2038) target = $region60
    $region59: #{residual_block_with_stride.1} parent=5 // pred_region
      %s2041 = ssub.s32 %s14, 2
      // Predicated region
      $region61: #{residual_block_with_stride.1} parent=59 // pred_check
        %p2042 = pneg %p216
      $region62: #{residual_block_with_stride.1} parent=59 // pred_check_branch
        %2044 = sbr.rel (%p2042) target = $region64
      $region63: #{residual_block_with_stride.1} parent=59 // pred_region
        %p2045 = scmp.lt.s32.totalorder %s20, 3
        %s2046 = scalar_select %p2045, %s20, 3
        %s2047 = smul.addr %s2046, 4
        %s2048 = smul.addr %s2047, 8
        %s2049 = scalar_lea.vmem %s8, %s2048
      $region64: #{residual_block_with_stride.1} parent=59 // pred_fallthru
        _
    $region60: #{residual_block_with_stride.1} parent=5 // pred_fallthru
      _
  $region6: #{residual_block_with_stride.1} parent=0 // loop_footer
    %s18 = sadd.s32 1, %s14
  $region7: #{residual_block_with_stride.1} parent=0 // loop_footer_branch
    %13 = sbr.rel target = $region3
  $region8: #{residual_block_with_stride.1} parent=0 // loop_exit
    _

</llo_original>
